<compile_context>
chip_gen: v7x
topology: tpu7x:2x2x1
jax: 0.10.0
libtpu: 0.0.40
codegen_flags: <defaults>
</compile_context>

<pallas_src>
import jax
import jax.numpy as jnp
from jax.experimental import pallas as pl
from jax.experimental.pallas import tpu as pltpu


def encoder_kernel(praw_ref, s0_ref, t0_ref, w1_ref, b1_ref, w2_ref, b2_ref,
                   w3_ref, b3_ref, w4_ref, b4_ref, s1_ref, t1_ref,
                   o_ref,
                   p1p_scr, lhs2_scr, fc1_scr):
    f32, bf16 = jnp.float32, jnp.bfloat16
    NR = praw_ref.shape[0]            # B * L  conv1 output rows (permuted)
    C = w1_ref.shape[1]               # 128
    B = o_ref.shape[0]                # batch
    HALF1 = NR // 2                   # L/2 * B  (pool1 rows)
    HALF2 = NR // 4                   # L/4 * B  (pool2 rows)
    L4 = HALF2 // B
    K2 = lhs2_scr.shape[1] // C       # 5
    PB = p1p_scr.shape[0] // 2        # (L4 + 2) * B rows per parity block

    # ---- norm0 (folded, per patch position) + relu0 on the im2col patches ---
    patches = jnp.maximum(praw_ref[...] * s0_ref[...] + t0_ref[...], 0.0)   # [NR, 8]

    # ---- conv1 + relu1: one MXU matmul; pool1 = half-split max --------------
    c1 = jnp.dot(patches, w1_ref[...], preferred_element_type=f32) + b1_ref[...]
    c1 = jnp.maximum(c1, 0.0)                                               # [NR, C]
    p1 = jnp.maximum(c1[:HALF1, :], c1[HALF1:, :])                          # [HALF1, C]

    # ---- stage pool1 in a parity-split, conv2-zero-padded scratch -----------
    # (zero only the pad row blocks; interior is written directly)
    zpad = jnp.zeros((B, C), f32)
    for par in range(2):
        base = par * PB
        p1p_scr[base:base + B, :] = zpad                                    # head pad
        p1p_scr[base + B + HALF2:base + PB, :] = zpad                       # tail pad
        p1p_scr[base + B:base + B + HALF2, :] = p1[par * HALF2:(par + 1) * HALF2, :]

    # ---- conv2 im2col: 2*K2 contiguous aligned tile copies -> bf16 LHS ------
    for half2 in range(2):
        for k in range(K2):
            q = half2 + k
            row0 = (q % 2) * PB + (q // 2) * B
            src = p1p_scr[row0:row0 + HALF2, :]
            lhs2_scr[half2 * HALF2:(half2 + 1) * HALF2,
                     k * C:(k + 1) * C] = src.astype(bf16)

    # ---- conv2 + relu2: one K = K2*C MXU matmul; pool2 = half-split max -----
    c2 = jnp.dot(lhs2_scr[...], w2_ref[...], preferred_element_type=f32) + b2_ref[...]
    c2 = jnp.maximum(c2, 0.0)                                               # [HALF1, C]
    p2 = jnp.maximum(c2[:HALF2, :], c2[HALF2:, :])                          # [HALF2, C]

    # ---- fc1 LHS: L4 aligned [B, C] tile copies -> [B, L4*C] ----------------
    for t4 in range(L4):
        fc1_scr[:, t4 * C:(t4 + 1) * C] = p2[t4 * B:(t4 + 1) * B, :]

    h3 = jnp.dot(fc1_scr[...].astype(bf16), w3_ref[...],
                 preferred_element_type=f32) + b3_ref[...]
    h3 = jnp.maximum(h3, 0.0)                                               # [B, H1]

    # ---- fc2 (lane-dense padded width) + folded final BN --------------------
    y = jnp.dot(h3.astype(bf16), w4_ref[...], preferred_element_type=f32) + b4_ref[...]
    o_ref[...] = y * s1_ref[...] + t1_ref[...]                              # [B, Dp]


def encoder_forward(x, p, eps=1e-5):
    """Pallas forward pass of Encoder. x: [B, L] f32, p: PyTorch-layout params."""
    B, L = x.shape
    assert L % 4 == 0, "input_size must be divisible by 4 (as in the module)"
    assert B % 8 == 0, "batch is assumed to be a multiple of 8 (sublane tile)"
    C = p["conv1_w"].shape[0]            # 128
    K1 = p["conv1_w"].shape[2]           # 7
    K2 = p["conv2_w"].shape[2]           # 5
    H1 = p["fc1_w"].shape[0]             # 256
    Dh = p["fc2_w"].shape[0]             # hidden_size
    L2, L4 = L // 2, L // 4
    P1 = K1 // 2
    K1p = 8                              # conv1 taps padded to 8 lanes
    Dp = ((Dh + 127) // 128) * 128       # lane-dense padded output width
    f32, bf16 = jnp.float32, jnp.bfloat16

    # ---- conv1 output-row permutation so both pools are half-split maxima ---
    # row block j <-> time t = half1 + 2*par2 + 4*q4 with j = (half1*2+par2)*L4+q4
    half1 = jnp.arange(2)
    par2 = jnp.arange(2)
    q4 = jnp.arange(L4)
    t_order = (half1[:, None, None] + 2 * par2[None, :, None]
               + 4 * q4[None, None, :]).reshape(-1)                         # [L]
    pos = t_order[:, None] + jnp.arange(K1)[None, :] - P1                   # [L, K1]
    valid = (pos >= 0) & (pos < L)
    pos_c = jnp.clip(pos, 0, L - 1)

    # im2col patch gather on the RAW input (pure layout plumbing, no arithmetic)
    praw = x.astype(f32)[:, pos_c]                                          # [B, L, K1]
    praw = jnp.transpose(praw, (1, 0, 2)).reshape(L * B, K1)                # rows ti*B + b
    praw = jnp.pad(praw, ((0, 0), (0, K1p - K1)))

    # BN0 folded into per-(t, k) scale/shift; zero on conv padding positions.
    inv0 = p["bn0_g"] / jnp.sqrt(p["bn0_rv"] + eps)
    s0f = inv0.astype(f32)
    t0f = (p["bn0_b"] - p["bn0_rm"] * inv0).astype(f32)
    S0 = jnp.where(valid, s0f[pos_c], 0.0)                                  # [L, K1]
    T0 = jnp.where(valid, t0f[pos_c], 0.0)
    S0 = jnp.pad(jnp.repeat(S0, B, axis=0), ((0, 0), (0, K1p - K1)))        # [L*B, 8]
    T0 = jnp.pad(jnp.repeat(T0, B, axis=0), ((0, 0), (0, K1p - K1)))

    # ---- one-time host-side parameter layout / folding ----------------------
    w1 = jnp.zeros((K1p, C), f32).at[:K1, :].set(p["conv1_w"][:, 0, :].T)
    b1 = p["conv1_b"].reshape(1, C).astype(f32)

    w2 = jnp.transpose(p["conv2_w"], (2, 1, 0)).reshape(K2 * C, C).astype(bf16)
    b2 = p["conv2_b"].reshape(1, C).astype(f32)

    # PyTorch Flatten order is (channel, time): column index = c*L4 + t
    w3 = jnp.transpose(p["fc1_w"].reshape(H1, C, L4), (2, 1, 0)).reshape(L4 * C, H1)
    w3 = w3.astype(bf16)
    b3 = p["fc1_b"].reshape(1, H1).astype(f32)

    w4 = jnp.zeros((H1, Dp), f32).at[:, :Dh].set(p["fc2_w"].T).astype(bf16)
    b4 = jnp.zeros((1, Dp), f32).at[:, :Dh].set(p["fc2_b"])
    inv1 = p["bn1_g"] / jnp.sqrt(p["bn1_rv"] + eps)
    s1 = jnp.zeros((1, Dp), f32).at[:, :Dh].set(inv1)
    t1 = jnp.zeros((1, Dp), f32).at[:, :Dh].set(p["bn1_b"] - p["bn1_rm"] * inv1)

    vmem = pl.BlockSpec(memory_space=pltpu.MemorySpace.VMEM)
    pad_blk = (L4 + 2) * B               # rows per parity block of padded pool1
    out = pl.pallas_call(
        encoder_kernel,
        out_shape=jax.ShapeDtypeStruct((B, Dp), f32),
        in_specs=[vmem] * 13,
        out_specs=vmem,
        scratch_shapes=[
            pltpu.VMEM((2 * pad_blk, C), f32),     # parity-split padded pool1
            pltpu.VMEM((L2 * B, K2 * C), bf16),    # conv2 im2col LHS
            pltpu.VMEM((B, L4 * C), f32),          # fc1 LHS
        ],
    )(praw, S0, T0, w1, b1, w2, b2, w3, b3, w4, b4, s1, t1)
    return out[:, :Dh]


def encoder_ref(x, p, eps=1e-5):
    """Pure-JAX reference that mirrors the PyTorch ops (inference-mode BN)."""
    B, L = x.shape
    C = p["conv1_w"].shape[0]
    L2, L4 = L // 2, L // 4
    h = (x - p["bn0_rm"]) / jnp.sqrt(p["bn0_rv"] + eps) * p["bn0_g"] + p["bn0_b"]
    h = jnp.maximum(h, 0.0)
    hp = jnp.pad(h, ((0, 0), (3, 3)))
    cols = jnp.stack([hp[:, k:k + L] for k in range(7)], axis=-1)            # [B, L, 7]
    c1 = jnp.einsum("btk,ck->bct", cols, p["conv1_w"][:, 0, :]) + p["conv1_b"][None, :, None]
    c1 = jnp.maximum(c1, 0.0)
    p1 = jnp.max(c1.reshape(B, C, L2, 2), axis=-1)                           # [B, C, L2]
    p1p = jnp.pad(p1, ((0, 0), (0, 0), (2, 2)))
    cols2 = jnp.stack([p1p[:, :, k:k + L2] for k in range(5)], axis=-1)      # [B, C, L2, 5]
    c2 = jnp.einsum("bitk,oik->bot", cols2, p["conv2_w"]) + p["conv2_b"][None, :, None]
    c2 = jnp.maximum(c2, 0.0)
    p2 = jnp.max(c2.reshape(B, C, L4, 2), axis=-1)                           # [B, C, L4]
    flat = p2.reshape(B, C * L4)                                             # (c, t) flatten
    f1 = jnp.maximum(flat @ p["fc1_w"].T + p["fc1_b"], 0.0)
    f2 = f1 @ p["fc2_w"].T + p["fc2_b"]
    return (f2 - p["bn1_rm"]) / jnp.sqrt(p["bn1_rv"] + eps) * p["bn1_g"] + p["bn1_b"]


if __name__ == "__main__":
    # Encoder(input_size=32, hidden_size=64), batch = 8.
    B, L, Dh = 8, 32, 64
    C, H1 = 128, 256
    L4 = L // 4
    f32 = jnp.float32

    key = jax.random.PRNGKey(0)
    ks = jax.random.split(key, 17)
    u = lambda k, shape, lim: jax.random.uniform(k, shape, f32, -lim, lim)

    x = jax.random.normal(ks[0], (B, L), f32)

    lim_c1 = 1.0 / (1 * 7) ** 0.5
    lim_c2 = 1.0 / (C * 5) ** 0.5
    lim_f1 = 1.0 / (C * L4) ** 0.5
    lim_f2 = 1.0 / H1 ** 0.5
    params = dict(
        bn0_g=jax.random.uniform(ks[1], (L,), f32, 0.5, 1.5),
        bn0_b=u(ks[2], (L,), 0.5),
        bn0_rm=u(ks[3], (L,), 0.5),
        bn0_rv=jax.random.uniform(ks[4], (L,), f32, 0.5, 1.5),
        conv1_w=u(ks[5], (C, 1, 7), lim_c1),
        conv1_b=u(ks[6], (C,), lim_c1),
        conv2_w=u(ks[7], (C, C, 5), lim_c2),
        conv2_b=u(ks[8], (C,), lim_c2),
        fc1_w=u(ks[9], (H1, C * L4), lim_f1),
        fc1_b=u(ks[10], (H1,), lim_f1),
        fc2_w=u(ks[11], (Dh, H1), lim_f2),
        fc2_b=u(ks[12], (Dh,), lim_f2),
        bn1_g=jax.random.uniform(ks[13], (Dh,), f32, 0.5, 1.5),
        bn1_b=u(ks[14], (Dh,), 0.5),
        bn1_rm=u(ks[15], (Dh,), 0.5),
        bn1_rv=jax.random.uniform(ks[16], (Dh,), f32, 0.5, 1.5),
    )

    out = encoder_forward(x, params)
    out = jax.block_until_ready(out)
    ref = encoder_ref(x, params)

    assert out.shape == (B, Dh)
    max_err = float(jnp.max(jnp.abs(out - ref)))
    # bf16 MXU operands with f32 accumulation -> expected error ~1e-3.
    assert jnp.allclose(out, ref, atol=2e-2, rtol=2e-2), f"max abs err {max_err}"

    print("KERNEL_OK")
</pallas_src>

<mosaic_0001>
module attributes {stable_mosaic.version = 11 : i64} {
  func.func @encoder_kernel(%arg0: memref<256x8xf32, #tpu.memory_space<vmem>>, %arg1: memref<256x8xf32, #tpu.memory_space<vmem>>, %arg2: memref<256x8xf32, #tpu.memory_space<vmem>>, %arg3: memref<8x128xf32, #tpu.memory_space<vmem>>, %arg4: memref<1x128xf32, #tpu.memory_space<vmem>>, %arg5: memref<640x128xbf16, #tpu.memory_space<vmem>>, %arg6: memref<1x128xf32, #tpu.memory_space<vmem>>, %arg7: memref<1024x256xbf16, #tpu.memory_space<vmem>>, %arg8: memref<1x256xf32, #tpu.memory_space<vmem>>, %arg9: memref<256x128xbf16, #tpu.memory_space<vmem>>, %arg10: memref<1x128xf32, #tpu.memory_space<vmem>>, %arg11: memref<1x128xf32, #tpu.memory_space<vmem>>, %arg12: memref<1x128xf32, #tpu.memory_space<vmem>>, %arg13: memref<8x128xf32, #tpu.memory_space<vmem>>, %arg14: memref<160x128xf32, #tpu.memory_space<vmem>>, %arg15: memref<128x640xbf16, #tpu.memory_space<vmem>>, %arg16: memref<8x1024xf32, #tpu.memory_space<vmem>>) attributes {dimension_semantics = [], scalar_prefetch = 0 : i64, scratch_operands = 3 : i64, tpu.core_type = #tpu.core_type<tc>} {
    %c0 = arith.constant 0 : index
    %c0_0 = arith.constant 0 : index
    %0 = vector.load %arg0[%c0, %c0_0] : memref<256x8xf32, #tpu.memory_space<vmem>>, vector<256x8xf32>
    %c0_1 = arith.constant 0 : index
    %c0_2 = arith.constant 0 : index
    %1 = vector.load %arg1[%c0_1, %c0_2] : memref<256x8xf32, #tpu.memory_space<vmem>>, vector<256x8xf32>
    %2 = arith.mulf %0, %1 : vector<256x8xf32>
    %c0_3 = arith.constant 0 : index
    %c0_4 = arith.constant 0 : index
    %3 = vector.load %arg2[%c0_3, %c0_4] : memref<256x8xf32, #tpu.memory_space<vmem>>, vector<256x8xf32>
    %4 = arith.addf %2, %3 : vector<256x8xf32>
    %cst = arith.constant 0.000000e+00 : f32
    %5 = vector.broadcast %cst : f32 to vector<256x8xf32>
    %6 = arith.maximumf %4, %5 : vector<256x8xf32>
    %c0_5 = arith.constant 0 : index
    %c0_6 = arith.constant 0 : index
    %7 = vector.load %arg3[%c0_5, %c0_6] : memref<8x128xf32, #tpu.memory_space<vmem>>, vector<8x128xf32>
    %cst_7 = arith.constant dense<0.000000e+00> : vector<256x128xf32>
    %8 = tpu.matmul %6, %7, %cst_7 {dimension_numbers = #tpu.dot_dimension_numbers<[1], [0], [0], [1], [0, 0, 1, 1], [], []>} : vector<256x8xf32>, vector<8x128xf32>, vector<256x128xf32> -> vector<256x128xf32>
    %c0_8 = arith.constant 0 : index
    %c0_9 = arith.constant 0 : index
    %9 = vector.load %arg4[%c0_8, %c0_9] : memref<1x128xf32, #tpu.memory_space<vmem>>, vector<1x128xf32>
    %10 = vector.broadcast %9 : vector<1x128xf32> to vector<256x128xf32>
    %11 = arith.addf %8, %10 : vector<256x128xf32>
    %cst_10 = arith.constant 0.000000e+00 : f32
    %12 = vector.broadcast %cst_10 : f32 to vector<256x128xf32>
    %13 = arith.maximumf %11, %12 : vector<256x128xf32>
    %14 = vector.extract_strided_slice %13 {offsets = [0, 0], sizes = [128, 128], strides = [1, 1]} : vector<256x128xf32> to vector<128x128xf32>
    %15 = vector.extract_strided_slice %13 {offsets = [128, 0], sizes = [128, 128], strides = [1, 1]} : vector<256x128xf32> to vector<128x128xf32>
    %16 = arith.maximumf %14, %15 : vector<128x128xf32>
    %cst_11 = arith.constant 0.000000e+00 : f32
    %17 = vector.broadcast %cst_11 : f32 to vector<8x128xf32>
    %c0_12 = arith.constant 0 : index
    %c0_13 = arith.constant 0 : index
    %18 = vector.load %arg14[%c0_12, %c0_13] : memref<160x128xf32, #tpu.memory_space<vmem>>, vector<8x128xf32>
    tpu.vector_store %arg14[%c0_12, %c0_13], %17 {strides = array<i32>} : memref<160x128xf32, #tpu.memory_space<vmem>>, vector<8x128xf32>,
    %c72 = arith.constant 72 : index
    %c0_14 = arith.constant 0 : index
    %19 = vector.load %arg14[%c72, %c0_14] : memref<160x128xf32, #tpu.memory_space<vmem>>, vector<8x128xf32>
    tpu.vector_store %arg14[%c72, %c0_14], %17 {strides = array<i32>} : memref<160x128xf32, #tpu.memory_space<vmem>>, vector<8x128xf32>,
    %20 = vector.extract_strided_slice %16 {offsets = [0, 0], sizes = [64, 128], strides = [1, 1]} : vector<128x128xf32> to vector<64x128xf32>
    %c8 = arith.constant 8 : index
    %c0_15 = arith.constant 0 : index
    %21 = vector.load %arg14[%c8, %c0_15] : memref<160x128xf32, #tpu.memory_space<vmem>>, vector<64x128xf32>
    tpu.vector_store %arg14[%c8, %c0_15], %20 {strides = array<i32>} : memref<160x128xf32, #tpu.memory_space<vmem>>, vector<64x128xf32>,
    %c80 = arith.constant 80 : index
    %c0_16 = arith.constant 0 : index
    %22 = vector.load %arg14[%c80, %c0_16] : memref<160x128xf32, #tpu.memory_space<vmem>>, vector<8x128xf32>
    tpu.vector_store %arg14[%c80, %c0_16], %17 {strides = array<i32>} : memref<160x128xf32, #tpu.memory_space<vmem>>, vector<8x128xf32>,
    %c152 = arith.constant 152 : index
    %c0_17 = arith.constant 0 : index
    %23 = vector.load %arg14[%c152, %c0_17] : memref<160x128xf32, #tpu.memory_space<vmem>>, vector<8x128xf32>
    tpu.vector_store %arg14[%c152, %c0_17], %17 {strides = array<i32>} : memref<160x128xf32, #tpu.memory_space<vmem>>, vector<8x128xf32>,
    %24 = vector.extract_strided_slice %16 {offsets = [64, 0], sizes = [64, 128], strides = [1, 1]} : vector<128x128xf32> to vector<64x128xf32>
    %c88 = arith.constant 88 : index
    %c0_18 = arith.constant 0 : index
    %25 = vector.load %arg14[%c88, %c0_18] : memref<160x128xf32, #tpu.memory_space<vmem>>, vector<64x128xf32>
    tpu.vector_store %arg14[%c88, %c0_18], %24 {strides = array<i32>} : memref<160x128xf32, #tpu.memory_space<vmem>>, vector<64x128xf32>,
    %c0_19 = arith.constant 0 : index
    %c0_20 = arith.constant 0 : index
    %26 = vector.load %arg14[%c0_19, %c0_20] : memref<160x128xf32, #tpu.memory_space<vmem>>, vector<64x128xf32>
    %27 = arith.truncf %26 : vector<64x128xf32> to vector<64x128xbf16>
    %c0_21 = arith.constant 0 : index
    %c0_22 = arith.constant 0 : index
    %28 = vector.load %arg15[%c0_21, %c0_22] : memref<128x640xbf16, #tpu.memory_space<vmem>>, vector<64x128xbf16>
    tpu.vector_store %arg15[%c0_21, %c0_22], %27 {strides = array<i32>} : memref<128x640xbf16, #tpu.memory_space<vmem>>, vector<64x128xbf16>,
    %c80_23 = arith.constant 80 : index
    %c0_24 = arith.constant 0 : index
    %29 = vector.load %arg14[%c80_23, %c0_24] : memref<160x128xf32, #tpu.memory_space<vmem>>, vector<64x128xf32>
    %30 = arith.truncf %29 : vector<64x128xf32> to vector<64x128xbf16>
    %c0_25 = arith.constant 0 : index
    %c128 = arith.constant 128 : index
    %31 = vector.load %arg15[%c0_25, %c128] : memref<128x640xbf16, #tpu.memory_space<vmem>>, vector<64x128xbf16>
    tpu.vector_store %arg15[%c0_25, %c128], %30 {strides = array<i32>} : memref<128x640xbf16, #tpu.memory_space<vmem>>, vector<64x128xbf16>,
    %c8_26 = arith.constant 8 : index
    %c0_27 = arith.constant 0 : index
    %32 = vector.load %arg14[%c8_26, %c0_27] : memref<160x128xf32, #tpu.memory_space<vmem>>, vector<64x128xf32>
    %33 = arith.truncf %32 : vector<64x128xf32> to vector<64x128xbf16>
    %c0_28 = arith.constant 0 : index
    %c256 = arith.constant 256 : index
    %34 = vector.load %arg15[%c0_28, %c256] : memref<128x640xbf16, #tpu.memory_space<vmem>>, vector<64x128xbf16>
    tpu.vector_store %arg15[%c0_28, %c256], %33 {strides = array<i32>} : memref<128x640xbf16, #tpu.memory_space<vmem>>, vector<64x128xbf16>,
    %c88_29 = arith.constant 88 : index
    %c0_30 = arith.constant 0 : index
    %35 = vector.load %arg14[%c88_29, %c0_30] : memref<160x128xf32, #tpu.memory_space<vmem>>, vector<64x128xf32>
    %36 = arith.truncf %35 : vector<64x128xf32> to vector<64x128xbf16>
    %c0_31 = arith.constant 0 : index
    %c384 = arith.constant 384 : index
    %37 = vector.load %arg15[%c0_31, %c384] : memref<128x640xbf16, #tpu.memory_space<vmem>>, vector<64x128xbf16>
    tpu.vector_store %arg15[%c0_31, %c384], %36 {strides = array<i32>} : memref<128x640xbf16, #tpu.memory_space<vmem>>, vector<64x128xbf16>,
    %c16 = arith.constant 16 : index
    %c0_32 = arith.constant 0 : index
    %38 = vector.load %arg14[%c16, %c0_32] : memref<160x128xf32, #tpu.memory_space<vmem>>, vector<64x128xf32>
    %39 = arith.truncf %38 : vector<64x128xf32> to vector<64x128xbf16>
    %c0_33 = arith.constant 0 : index
    %c512 = arith.constant 512 : index
    %40 = vector.load %arg15[%c0_33, %c512] : memref<128x640xbf16, #tpu.memory_space<vmem>>, vector<64x128xbf16>
    tpu.vector_store %arg15[%c0_33, %c512], %39 {strides = array<i32>} : memref<128x640xbf16, #tpu.memory_space<vmem>>, vector<64x128xbf16>,
    %c80_34 = arith.constant 80 : index
    %c0_35 = arith.constant 0 : index
    %41 = vector.load %arg14[%c80_34, %c0_35] : memref<160x128xf32, #tpu.memory_space<vmem>>, vector<64x128xf32>
    %42 = arith.truncf %41 : vector<64x128xf32> to vector<64x128xbf16>
    %c64 = arith.constant 64 : index
    %c0_36 = arith.constant 0 : index
    %43 = vector.load %arg15[%c64, %c0_36] : memref<128x640xbf16, #tpu.memory_space<vmem>>, vector<64x128xbf16>
    tpu.vector_store %arg15[%c64, %c0_36], %42 {strides = array<i32>} : memref<128x640xbf16, #tpu.memory_space<vmem>>, vector<64x128xbf16>,
    %c8_37 = arith.constant 8 : index
    %c0_38 = arith.constant 0 : index
    %44 = vector.load %arg14[%c8_37, %c0_38] : memref<160x128xf32, #tpu.memory_space<vmem>>, vector<64x128xf32>
    %45 = arith.truncf %44 : vector<64x128xf32> to vector<64x128xbf16>
    %c64_39 = arith.constant 64 : index
    %c128_40 = arith.constant 128 : index
    %46 = vector.load %arg15[%c64_39, %c128_40] : memref<128x640xbf16, #tpu.memory_space<vmem>>, vector<64x128xbf16>
    tpu.vector_store %arg15[%c64_39, %c128_40], %45 {strides = array<i32>} : memref<128x640xbf16, #tpu.memory_space<vmem>>, vector<64x128xbf16>,
    %c88_41 = arith.constant 88 : index
    %c0_42 = arith.constant 0 : index
    %47 = vector.load %arg14[%c88_41, %c0_42] : memref<160x128xf32, #tpu.memory_space<vmem>>, vector<64x128xf32>
    %48 = arith.truncf %47 : vector<64x128xf32> to vector<64x128xbf16>
    %c64_43 = arith.constant 64 : index
    %c256_44 = arith.constant 256 : index
    %49 = vector.load %arg15[%c64_43, %c256_44] : memref<128x640xbf16, #tpu.memory_space<vmem>>, vector<64x128xbf16>
    tpu.vector_store %arg15[%c64_43, %c256_44], %48 {strides = array<i32>} : memref<128x640xbf16, #tpu.memory_space<vmem>>, vector<64x128xbf16>,
    %c16_45 = arith.constant 16 : index
    %c0_46 = arith.constant 0 : index
    %50 = vector.load %arg14[%c16_45, %c0_46] : memref<160x128xf32, #tpu.memory_space<vmem>>, vector<64x128xf32>
    %51 = arith.truncf %50 : vector<64x128xf32> to vector<64x128xbf16>
    %c64_47 = arith.constant 64 : index
    %c384_48 = arith.constant 384 : index
    %52 = vector.load %arg15[%c64_47, %c384_48] : memref<128x640xbf16, #tpu.memory_space<vmem>>, vector<64x128xbf16>
    tpu.vector_store %arg15[%c64_47, %c384_48], %51 {strides = array<i32>} : memref<128x640xbf16, #tpu.memory_space<vmem>>, vector<64x128xbf16>,
    %c96 = arith.constant 96 : index
    %c0_49 = arith.constant 0 : index
    %53 = vector.load %arg14[%c96, %c0_49] : memref<160x128xf32, #tpu.memory_space<vmem>>, vector<64x128xf32>
    %54 = arith.truncf %53 : vector<64x128xf32> to vector<64x128xbf16>
    %c64_50 = arith.constant 64 : index
    %c512_51 = arith.constant 512 : index
    %55 = vector.load %arg15[%c64_50, %c512_51] : memref<128x640xbf16, #tpu.memory_space<vmem>>, vector<64x128xbf16>
    tpu.vector_store %arg15[%c64_50, %c512_51], %54 {strides = array<i32>} : memref<128x640xbf16, #tpu.memory_space<vmem>>, vector<64x128xbf16>,
    %c0_52 = arith.constant 0 : index
    %c0_53 = arith.constant 0 : index
    %56 = vector.load %arg15[%c0_52, %c0_53] : memref<128x640xbf16, #tpu.memory_space<vmem>>, vector<128x640xbf16>
    %c0_54 = arith.constant 0 : index
    %c0_55 = arith.constant 0 : index
    %57 = vector.load %arg5[%c0_54, %c0_55] : memref<640x128xbf16, #tpu.memory_space<vmem>>, vector<640x128xbf16>
    %cst_56 = arith.constant dense<0.000000e+00> : vector<128x128xf32>
    %58 = tpu.matmul %56, %57, %cst_56 {dimension_numbers = #tpu.dot_dimension_numbers<[1], [0], [0], [1], [0, 0, 1, 1], [], []>} : vector<128x640xbf16>, vector<640x128xbf16>, vector<128x128xf32> -> vector<128x128xf32>
    %c0_57 = arith.constant 0 : index
    %c0_58 = arith.constant 0 : index
    %59 = vector.load %arg6[%c0_57, %c0_58] : memref<1x128xf32, #tpu.memory_space<vmem>>, vector<1x128xf32>
    %60 = vector.broadcast %59 : vector<1x128xf32> to vector<128x128xf32>
    %61 = arith.addf %58, %60 : vector<128x128xf32>
    %cst_59 = arith.constant 0.000000e+00 : f32
    %62 = vector.broadcast %cst_59 : f32 to vector<128x128xf32>
    %63 = arith.maximumf %61, %62 : vector<128x128xf32>
    %64 = vector.extract_strided_slice %63 {offsets = [0, 0], sizes = [64, 128], strides = [1, 1]} : vector<128x128xf32> to vector<64x128xf32>
    %65 = vector.extract_strided_slice %63 {offsets = [64, 0], sizes = [64, 128], strides = [1, 1]} : vector<128x128xf32> to vector<64x128xf32>
    %66 = arith.maximumf %64, %65 : vector<64x128xf32>
    %67 = vector.extract_strided_slice %66 {offsets = [0, 0], sizes = [8, 128], strides = [1, 1]} : vector<64x128xf32> to vector<8x128xf32>
    %c0_60 = arith.constant 0 : index
    %c0_61 = arith.constant 0 : index
    %68 = vector.load %arg16[%c0_60, %c0_61] : memref<8x1024xf32, #tpu.memory_space<vmem>>, vector<8x128xf32>
    tpu.vector_store %arg16[%c0_60, %c0_61], %67 {strides = array<i32>} : memref<8x1024xf32, #tpu.memory_space<vmem>>, vector<8x128xf32>,
    %69 = vector.extract_strided_slice %66 {offsets = [8, 0], sizes = [8, 128], strides = [1, 1]} : vector<64x128xf32> to vector<8x128xf32>
    %c0_62 = arith.constant 0 : index
    %c128_63 = arith.constant 128 : index
    %70 = vector.load %arg16[%c0_62, %c128_63] : memref<8x1024xf32, #tpu.memory_space<vmem>>, vector<8x128xf32>
    tpu.vector_store %arg16[%c0_62, %c128_63], %69 {strides = array<i32>} : memref<8x1024xf32, #tpu.memory_space<vmem>>, vector<8x128xf32>,
    %71 = vector.extract_strided_slice %66 {offsets = [16, 0], sizes = [8, 128], strides = [1, 1]} : vector<64x128xf32> to vector<8x128xf32>
    %c0_64 = arith.constant 0 : index
    %c256_65 = arith.constant 256 : index
    %72 = vector.load %arg16[%c0_64, %c256_65] : memref<8x1024xf32, #tpu.memory_space<vmem>>, vector<8x128xf32>
    tpu.vector_store %arg16[%c0_64, %c256_65], %71 {strides = array<i32>} : memref<8x1024xf32, #tpu.memory_space<vmem>>, vector<8x128xf32>,
    %73 = vector.extract_strided_slice %66 {offsets = [24, 0], sizes = [8, 128], strides = [1, 1]} : vector<64x128xf32> to vector<8x128xf32>
    %c0_66 = arith.constant 0 : index
    %c384_67 = arith.constant 384 : index
    %74 = vector.load %arg16[%c0_66, %c384_67] : memref<8x1024xf32, #tpu.memory_space<vmem>>, vector<8x128xf32>
    tpu.vector_store %arg16[%c0_66, %c384_67], %73 {strides = array<i32>} : memref<8x1024xf32, #tpu.memory_space<vmem>>, vector<8x128xf32>,
    %75 = vector.extract_strided_slice %66 {offsets = [32, 0], sizes = [8, 128], strides = [1, 1]} : vector<64x128xf32> to vector<8x128xf32>
    %c0_68 = arith.constant 0 : index
    %c512_69 = arith.constant 512 : index
    %76 = vector.load %arg16[%c0_68, %c512_69] : memref<8x1024xf32, #tpu.memory_space<vmem>>, vector<8x128xf32>
    tpu.vector_store %arg16[%c0_68, %c512_69], %75 {strides = array<i32>} : memref<8x1024xf32, #tpu.memory_space<vmem>>, vector<8x128xf32>,
    %77 = vector.extract_strided_slice %66 {offsets = [40, 0], sizes = [8, 128], strides = [1, 1]} : vector<64x128xf32> to vector<8x128xf32>
    %c0_70 = arith.constant 0 : index
    %c640 = arith.constant 640 : index
    %78 = vector.load %arg16[%c0_70, %c640] : memref<8x1024xf32, #tpu.memory_space<vmem>>, vector<8x128xf32>
    tpu.vector_store %arg16[%c0_70, %c640], %77 {strides = array<i32>} : memref<8x1024xf32, #tpu.memory_space<vmem>>, vector<8x128xf32>,
    %79 = vector.extract_strided_slice %66 {offsets = [48, 0], sizes = [8, 128], strides = [1, 1]} : vector<64x128xf32> to vector<8x128xf32>
    %c0_71 = arith.constant 0 : index
    %c768 = arith.constant 768 : index
    %80 = vector.load %arg16[%c0_71, %c768] : memref<8x1024xf32, #tpu.memory_space<vmem>>, vector<8x128xf32>
    tpu.vector_store %arg16[%c0_71, %c768], %79 {strides = array<i32>} : memref<8x1024xf32, #tpu.memory_space<vmem>>, vector<8x128xf32>,
    %81 = vector.extract_strided_slice %66 {offsets = [56, 0], sizes = [8, 128], strides = [1, 1]} : vector<64x128xf32> to vector<8x128xf32>
    %c0_72 = arith.constant 0 : index
    %c896 = arith.constant 896 : index
    %82 = vector.load %arg16[%c0_72, %c896] : memref<8x1024xf32, #tpu.memory_space<vmem>>, vector<8x128xf32>
    tpu.vector_store %arg16[%c0_72, %c896], %81 {strides = array<i32>} : memref<8x1024xf32, #tpu.memory_space<vmem>>, vector<8x128xf32>,
    %c0_73 = arith.constant 0 : index
    %c0_74 = arith.constant 0 : index
    %83 = vector.load %arg16[%c0_73, %c0_74] : memref<8x1024xf32, #tpu.memory_space<vmem>>, vector<8x1024xf32>
    %84 = arith.truncf %83 : vector<8x1024xf32> to vector<8x1024xbf16>
    %c0_75 = arith.constant 0 : index
    %c0_76 = arith.constant 0 : index
    %85 = vector.load %arg7[%c0_75, %c0_76] : memref<1024x256xbf16, #tpu.memory_space<vmem>>, vector<1024x256xbf16>
    %cst_77 = arith.constant dense<0.000000e+00> : vector<8x256xf32>
    %86 = tpu.matmul %84, %85, %cst_77 {dimension_numbers = #tpu.dot_dimension_numbers<[1], [0], [0], [1], [0, 0, 1, 1], [], []>} : vector<8x1024xbf16>, vector<1024x256xbf16>, vector<8x256xf32> -> vector<8x256xf32>
    %c0_78 = arith.constant 0 : index
    %c0_79 = arith.constant 0 : index
    %87 = vector.load %arg8[%c0_78, %c0_79] : memref<1x256xf32, #tpu.memory_space<vmem>>, vector<1x256xf32>
    %88 = vector.broadcast %87 : vector<1x256xf32> to vector<8x256xf32>
    %89 = arith.addf %86, %88 : vector<8x256xf32>
    %cst_80 = arith.constant 0.000000e+00 : f32
    %90 = vector.broadcast %cst_80 : f32 to vector<8x256xf32>
    %91 = arith.maximumf %89, %90 : vector<8x256xf32>
    %92 = arith.truncf %91 : vector<8x256xf32> to vector<8x256xbf16>
    %c0_81 = arith.constant 0 : index
    %c0_82 = arith.constant 0 : index
    %93 = vector.load %arg9[%c0_81, %c0_82] : memref<256x128xbf16, #tpu.memory_space<vmem>>, vector<256x128xbf16>
    %cst_83 = arith.constant dense<0.000000e+00> : vector<8x128xf32>
    %94 = tpu.matmul %92, %93, %cst_83 {dimension_numbers = #tpu.dot_dimension_numbers<[1], [0], [0], [1], [0, 0, 1, 1], [], []>} : vector<8x256xbf16>, vector<256x128xbf16>, vector<8x128xf32> -> vector<8x128xf32>
    %c0_84 = arith.constant 0 : index
    %c0_85 = arith.constant 0 : index
    %95 = vector.load %arg10[%c0_84, %c0_85] : memref<1x128xf32, #tpu.memory_space<vmem>>, vector<1x128xf32>
    %96 = vector.broadcast %95 : vector<1x128xf32> to vector<8x128xf32>
    %97 = arith.addf %94, %96 : vector<8x128xf32>
    %c0_86 = arith.constant 0 : index
    %c0_87 = arith.constant 0 : index
    %98 = vector.load %arg11[%c0_86, %c0_87] : memref<1x128xf32, #tpu.memory_space<vmem>>, vector<1x128xf32>
    %99 = vector.broadcast %98 : vector<1x128xf32> to vector<8x128xf32>
    %100 = arith.mulf %97, %99 : vector<8x128xf32>
    %c0_88 = arith.constant 0 : index
    %c0_89 = arith.constant 0 : index
    %101 = vector.load %arg12[%c0_88, %c0_89] : memref<1x128xf32, #tpu.memory_space<vmem>>, vector<1x128xf32>
    %102 = vector.broadcast %101 : vector<1x128xf32> to vector<8x128xf32>
    %103 = arith.addf %100, %102 : vector<8x128xf32>
    %c0_90 = arith.constant 0 : index
    %c0_91 = arith.constant 0 : index
    %104 = vector.load %arg13[%c0_90, %c0_91] : memref<8x128xf32, #tpu.memory_space<vmem>>, vector<8x128xf32>
    tpu.vector_store %arg13[%c0_90, %c0_91], %103 {strides = array<i32>} : memref<8x128xf32, #tpu.memory_space<vmem>>, vector<8x128xf32>,
    return
  }
}

</mosaic_0001>

<llo_original>
// kernel: tpu_custom_call.1
$region0: #{tpu_custom_call.1}
  #allocation0 [shape = 'u32[]', space=smem, size = 0x4, offset = 0x4, fixed_abs, tag = 'smem constant byte address 0x4 - core index']
  #allocation1 [shape = 'u32[144,128]{1,0:T(1,128)}', space=vmem, size = 0x12000, scoped, tag = 'internal scratch']
  #allocation2 [shape = 'f32[160,128]{1,0:T(8,128)}', space=vmem, size = 0x14000, scoped, tag = 'scratch operand']
  #allocation3 [shape = 'bf16[128,640]{1,0:T(16,128)(2,1)}', space=vmem, size = 0x28000, scoped, tag = 'scratch operand']
  #allocation4 [shape = 'f32[8,1024]{1,0:T(8,128)}', space=vmem, size = 0x8000, scoped, tag = 'scratch operand']
  %s0 = inlined_call_operand.vmem [shape: f32[256,8], index: 0, kind: input, shape index: {}]
  %s1 = inlined_call_operand.vmem [shape: f32[256,8], index: 1, kind: input, shape index: {}]
  %s2 = inlined_call_operand.vmem [shape: f32[256,8], index: 2, kind: input, shape index: {}]
  %s3 = inlined_call_operand.vmem [shape: f32[8,128], index: 3, kind: input, shape index: {}]
  %s4 = inlined_call_operand.vmem [shape: f32[1,128], index: 4, kind: input, shape index: {}]
  %s5 = inlined_call_operand.vmem [shape: bf16[640,128], index: 5, kind: input, shape index: {}]
  %s6 = inlined_call_operand.vmem [shape: f32[1,128], index: 6, kind: input, shape index: {}]
  %s7 = inlined_call_operand.hbm [shape: bf16[1024,256], index: 7, kind: input, shape index: {}]
  %s8 = inlined_call_operand.vmem [shape: f32[1,256], index: 8, kind: input, shape index: {}]
  %s9 = inlined_call_operand.vmem [shape: bf16[256,128], index: 9, kind: input, shape index: {}]
  %s10 = inlined_call_operand.vmem [shape: f32[1,128], index: 10, kind: input, shape index: {}]
  %s11 = inlined_call_operand.vmem [shape: f32[1,128], index: 11, kind: input, shape index: {}]
  %s12 = inlined_call_operand.vmem [shape: f32[1,128], index: 12, kind: input, shape index: {}]
  %s13 = inlined_call_operand.hbm [shape: f32[8,128], index: 13, kind: output, shape index: {}]
  %s14 = sld [smem:[#allocation0]]
  $region66: #{tpu_custom_call.1} parent=0
    _
  %s16 = ssub.s32 1, %s14
  %s17 = scalar_select 0, %s16, %s14
  $region1: #{tpu_custom_call.1} parent=0
    #allocation5 [shape = 'u8[524288]{0}', space=vmem, size = 0x80000, scoped, tag = 'input window, operand 7, single buffered']
    #allocation6 [shape = 's32[1]{0}', space=sflag, size = 0x4, scoped, tag = 'scoped memory for tpu_custom_call.1']
    #allocation7 [shape = 's32[1]{0}', space=sflag, size = 0x4, scoped, tag = 'scoped memory for tpu_custom_call.1']
    #allocation8 [shape = 'u8[4096]{0}', space=vmem, size = 0x1000, scoped, tag = 'output window, operand 0, single buffered']
    %18 = vsyncpa [#allocation6], 0
    %19 = vsyncpa [#allocation7], 0
    // Predicated region
    $region2: #{tpu_custom_call.1} parent=1 // pred_check
      _
    $region3: #{tpu_custom_call.1} parent=1 // pred_check_branch
      %21 = sbr.rel (0) target = $region5
    $region4: #{tpu_custom_call.1} parent=1 // pred_region
      _
    $region5: #{tpu_custom_call.1} parent=1 // pred_fallthru
      _
    // Predicated region
    $region6: #{tpu_custom_call.1} parent=1 // pred_check
      _
    $region7: #{tpu_custom_call.1} parent=1 // pred_check_branch
      %23 = sbr.rel (0) target = $region9
    $region8: #{tpu_custom_call.1} parent=1 // pred_region
      _
    $region9: #{tpu_custom_call.1} parent=1 // pred_fallthru
      _
    // Predicated region
    $region10: #{tpu_custom_call.1} parent=1 // pred_check
      _
    $region11: #{tpu_custom_call.1} parent=1 // pred_check_branch
      %25 = sbr.rel (0) target = $region13
    $region12: #{tpu_custom_call.1} parent=1 // pred_region
      _
    $region13: #{tpu_custom_call.1} parent=1 // pred_fallthru
      _
    // Predicated region
    $region14: #{tpu_custom_call.1} parent=1 // pred_check
      _
    $region15: #{tpu_custom_call.1} parent=1 // pred_check_branch
      %27 = sbr.rel (0) target = $region17
    $region16: #{tpu_custom_call.1} parent=1 // pred_region
      _
    $region17: #{tpu_custom_call.1} parent=1 // pred_fallthru
      _
    // Predicated region
    $region18: #{tpu_custom_call.1} parent=1 // pred_check
      _
    $region19: #{tpu_custom_call.1} parent=1 // pred_check_branch
      %29 = sbr.rel (0) target = $region21
    $region20: #{tpu_custom_call.1} parent=1 // pred_region
      _
    $region21: #{tpu_custom_call.1} parent=1 // pred_fallthru
      _
    // Predicated region
    $region22: #{tpu_custom_call.1} parent=1 // pred_check
      _
    $region23: #{tpu_custom_call.1} parent=1 // pred_check_branch
      %31 = sbr.rel (0) target = $region25
    $region24: #{tpu_custom_call.1} parent=1 // pred_region
      _
    $region25: #{tpu_custom_call.1} parent=1 // pred_fallthru
      _
    // Predicated region
    $region26: #{tpu_custom_call.1} parent=1 // pred_check
      _
    $region27: #{tpu_custom_call.1} parent=1 // pred_check_branch
      %33 = sbr.rel (0) target = $region29
    $region28: #{tpu_custom_call.1} parent=1 // pred_region
      _
    $region29: #{tpu_custom_call.1} parent=1 // pred_fallthru
      _
    // Predicated region
    $region30: #{tpu_custom_call.1} parent=1 // pred_check
      _
    $region31: #{tpu_custom_call.1} parent=1 // pred_check_branch
      %35 = sbr.rel (0) target = $region33
    $region32: #{tpu_custom_call.1} parent=1 // pred_region
      %s37 = ssub.s32 16384, 16384
      %38 = vsyncadd [#allocation6], %s37
      %s39 = sshll.u32 [#allocation5], 4
      %s40 = int_to_ptr.vmem [resolvable:$true] %s39
      %45 = dma.hbm_to_vmem [thread:$0]  %s7, 16384, %s40, [#allocation6], 128, 128, 8
    $region33: #{tpu_custom_call.1} parent=1 // pred_fallthru
      _
    // Predicated region
    $region34: #{tpu_custom_call.1} parent=1 // pred_check
      _
    $region35: #{tpu_custom_call.1} parent=1 // pred_check_branch
      %47 = sbr.rel (0) target = $region37
    $region36: #{tpu_custom_call.1} parent=1 // pred_region
      _
    $region37: #{tpu_custom_call.1} parent=1 // pred_fallthru
      _
    // Predicated region
    $region38: #{tpu_custom_call.1} parent=1 // pred_check
      _
    $region39: #{tpu_custom_call.1} parent=1 // pred_check_branch
      %49 = sbr.rel (0) target = $region41
    $region40: #{tpu_custom_call.1} parent=1 // pred_region
      _
    $region41: #{tpu_custom_call.1} parent=1 // pred_fallthru
      _
    // Predicated region
    $region42: #{tpu_custom_call.1} parent=1 // pred_check
      _
    $region43: #{tpu_custom_call.1} parent=1 // pred_check_branch
      %51 = sbr.rel (0) target = $region45
    $region44: #{tpu_custom_call.1} parent=1 // pred_region
      _
    $region45: #{tpu_custom_call.1} parent=1 // pred_fallthru
      _
    // Predicated region
    $region46: #{tpu_custom_call.1} parent=1 // pred_check
      _
    $region47: #{tpu_custom_call.1} parent=1 // pred_check_branch
      %53 = sbr.rel (0) target = $region49
    $region48: #{tpu_custom_call.1} parent=1 // pred_region
      _
    $region49: #{tpu_custom_call.1} parent=1 // pred_fallthru
      _
    // Predicated region
    $region50: #{tpu_custom_call.1} parent=1 // pred_check
      _
    $region51: #{tpu_custom_call.1} parent=1 // pred_check_branch
      %55 = sbr.rel (0) target = $region53
    $region52: #{tpu_custom_call.1} parent=1 // pred_region
      _
    $region53: #{tpu_custom_call.1} parent=1 // pred_fallthru
      _
    // Predicated region
    $region54: #{tpu_custom_call.1} parent=1 // pred_check
      _
    $region55: #{tpu_custom_call.1} parent=1 // pred_check_branch
      %57 = sbr.rel (0) target = $region57
    $region56: #{tpu_custom_call.1} parent=1 // pred_region
      %58 = dma.done [#allocation6], 16384
    $region57: #{tpu_custom_call.1} parent=1 // pred_fallthru
      _
    %v60 = vld [vmem:[%s0] sm:$0xff]
    %v61 = vld [vmem:[%s0 + $0x8] sm:$0xff]
    %v62 = vld [vmem:[%s0 + $0x10] sm:$0xff]
    %v63 = vld [vmem:[%s0 + $0x18] sm:$0xff]
    %v64 = vld [vmem:[%s0 + $0x20] sm:$0xff]
    %v65 = vld [vmem:[%s0 + $0x28] sm:$0xff]
    %v66 = vld [vmem:[%s0 + $0x30] sm:$0xff]
    %v67 = vld [vmem:[%s0 + $0x38] sm:$0xff]
    %v68 = vld [vmem:[%s0 + $0x40] sm:$0xff]
    %v69 = vld [vmem:[%s0 + $0x48] sm:$0xff]
    %v70 = vld [vmem:[%s0 + $0x50] sm:$0xff]
    %v71 = vld [vmem:[%s0 + $0x58] sm:$0xff]
    %v72 = vld [vmem:[%s0 + $0x60] sm:$0xff]
    %v73 = vld [vmem:[%s0 + $0x68] sm:$0xff]
    %v74 = vld [vmem:[%s0 + $0x70] sm:$0xff]
    %v75 = vld [vmem:[%s0 + $0x78] sm:$0xff]
    %v76 = vld [vmem:[%s0 + $0x80] sm:$0xff]
    %v77 = vld [vmem:[%s0 + $0x88] sm:$0xff]
    %v78 = vld [vmem:[%s0 + $0x90] sm:$0xff]
    %v79 = vld [vmem:[%s0 + $0x98] sm:$0xff]
    %v80 = vld [vmem:[%s0 + $0xa0] sm:$0xff]
    %v81 = vld [vmem:[%s0 + $0xa8] sm:$0xff]
    %v82 = vld [vmem:[%s0 + $0xb0] sm:$0xff]
    %v83 = vld [vmem:[%s0 + $0xb8] sm:$0xff]
    %v84 = vld [vmem:[%s0 + $0xc0] sm:$0xff]
    %v85 = vld [vmem:[%s0 + $0xc8] sm:$0xff]
    %v86 = vld [vmem:[%s0 + $0xd0] sm:$0xff]
    %v87 = vld [vmem:[%s0 + $0xd8] sm:$0xff]
    %v88 = vld [vmem:[%s0 + $0xe0] sm:$0xff]
    %v89 = vld [vmem:[%s0 + $0xe8] sm:$0xff]
    %v90 = vld [vmem:[%s0 + $0xf0] sm:$0xff]
    %v91 = vld [vmem:[%s0 + $0xf8] sm:$0xff]
    %v92 = vld [vmem:[%s1] sm:$0xff]
    %v93 = vld [vmem:[%s1 + $0x8] sm:$0xff]
    %v94 = vld [vmem:[%s1 + $0x10] sm:$0xff]
    %v95 = vld [vmem:[%s1 + $0x18] sm:$0xff]
    %v96 = vld [vmem:[%s1 + $0x20] sm:$0xff]
    %v97 = vld [vmem:[%s1 + $0x28] sm:$0xff]
    %v98 = vld [vmem:[%s1 + $0x30] sm:$0xff]
    %v99 = vld [vmem:[%s1 + $0x38] sm:$0xff]
    %v100 = vld [vmem:[%s1 + $0x40] sm:$0xff]
    %v101 = vld [vmem:[%s1 + $0x48] sm:$0xff]
    %v102 = vld [vmem:[%s1 + $0x50] sm:$0xff]
    %v103 = vld [vmem:[%s1 + $0x58] sm:$0xff]
    %v104 = vld [vmem:[%s1 + $0x60] sm:$0xff]
    %v105 = vld [vmem:[%s1 + $0x68] sm:$0xff]
    %v106 = vld [vmem:[%s1 + $0x70] sm:$0xff]
    %v107 = vld [vmem:[%s1 + $0x78] sm:$0xff]
    %v108 = vld [vmem:[%s1 + $0x80] sm:$0xff]
    %v109 = vld [vmem:[%s1 + $0x88] sm:$0xff]
    %v110 = vld [vmem:[%s1 + $0x90] sm:$0xff]
    %v111 = vld [vmem:[%s1 + $0x98] sm:$0xff]
    %v112 = vld [vmem:[%s1 + $0xa0] sm:$0xff]
    %v113 = vld [vmem:[%s1 + $0xa8] sm:$0xff]
    %v114 = vld [vmem:[%s1 + $0xb0] sm:$0xff]
    %v115 = vld [vmem:[%s1 + $0xb8] sm:$0xff]
    %v116 = vld [vmem:[%s1 + $0xc0] sm:$0xff]
    %v117 = vld [vmem:[%s1 + $0xc8] sm:$0xff]
    %v118 = vld [vmem:[%s1 + $0xd0] sm:$0xff]
    %v119 = vld [vmem:[%s1 + $0xd8] sm:$0xff]
    %v120 = vld [vmem:[%s1 + $0xe0] sm:$0xff]
    %v121 = vld [vmem:[%s1 + $0xe8] sm:$0xff]
    %v122 = vld [vmem:[%s1 + $0xf0] sm:$0xff]
    %v123 = vld [vmem:[%s1 + $0xf8] sm:$0xff]
    %v124 = vmul.f32 %v60, %v92
    %v125 = vmul.f32 %v61, %v93
    %v126 = vmul.f32 %v62, %v94
    %v127 = vmul.f32 %v63, %v95
    %v128 = vmul.f32 %v64, %v96
    %v129 = vmul.f32 %v65, %v97
    %v130 = vmul.f32 %v66, %v98
    %v131 = vmul.f32 %v67, %v99
    %v132 = vmul.f32 %v68, %v100
    %v133 = vmul.f32 %v69, %v101
    %v134 = vmul.f32 %v70, %v102
    %v135 = vmul.f32 %v71, %v103
    %v136 = vmul.f32 %v72, %v104
    %v137 = vmul.f32 %v73, %v105
    %v138 = vmul.f32 %v74, %v106
    %v139 = vmul.f32 %v75, %v107
    %v140 = vmul.f32 %v76, %v108
    %v141 = vmul.f32 %v77, %v109
    %v142 = vmul.f32 %v78, %v110
    %v143 = vmul.f32 %v79, %v111
    %v144 = vmul.f32 %v80, %v112
    %v145 = vmul.f32 %v81, %v113
    %v146 = vmul.f32 %v82, %v114
    %v147 = vmul.f32 %v83, %v115
    %v148 = vmul.f32 %v84, %v116
    %v149 = vmul.f32 %v85, %v117
    %v150 = vmul.f32 %v86, %v118
    %v151 = vmul.f32 %v87, %v119
    %v152 = vmul.f32 %v88, %v120
    %v153 = vmul.f32 %v89, %v121
    %v154 = vmul.f32 %v90, %v122
    %v155 = vmul.f32 %v91, %v123
    %v156 = vld [vmem:[%s2] sm:$0xff]
    %v157 = vld [vmem:[%s2 + $0x8] sm:$0xff]
    %v158 = vld [vmem:[%s2 + $0x10] sm:$0xff]
    %v159 = vld [vmem:[%s2 + $0x18] sm:$0xff]
    %v160 = vld [vmem:[%s2 + $0x20] sm:$0xff]
    %v161 = vld [vmem:[%s2 + $0x28] sm:$0xff]
    %v162 = vld [vmem:[%s2 + $0x30] sm:$0xff]
    %v163 = vld [vmem:[%s2 + $0x38] sm:$0xff]
    %v164 = vld [vmem:[%s2 + $0x40] sm:$0xff]
    %v165 = vld [vmem:[%s2 + $0x48] sm:$0xff]
    %v166 = vld [vmem:[%s2 + $0x50] sm:$0xff]
    %v167 = vld [vmem:[%s2 + $0x58] sm:$0xff]
    %v168 = vld [vmem:[%s2 + $0x60] sm:$0xff]
    %v169 = vld [vmem:[%s2 + $0x68] sm:$0xff]
    %v170 = vld [vmem:[%s2 + $0x70] sm:$0xff]
    %v171 = vld [vmem:[%s2 + $0x78] sm:$0xff]
    %v172 = vld [vmem:[%s2 + $0x80] sm:$0xff]
    %v173 = vld [vmem:[%s2 + $0x88] sm:$0xff]
    %v174 = vld [vmem:[%s2 + $0x90] sm:$0xff]
    %v175 = vld [vmem:[%s2 + $0x98] sm:$0xff]
    %v176 = vld [vmem:[%s2 + $0xa0] sm:$0xff]
    %v177 = vld [vmem:[%s2 + $0xa8] sm:$0xff]
    %v178 = vld [vmem:[%s2 + $0xb0] sm:$0xff]
    %v179 = vld [vmem:[%s2 + $0xb8] sm:$0xff]
    %v180 = vld [vmem:[%s2 + $0xc0] sm:$0xff]
    %v181 = vld [vmem:[%s2 + $0xc8] sm:$0xff]
    %v182 = vld [vmem:[%s2 + $0xd0] sm:$0xff]
    %v183 = vld [vmem:[%s2 + $0xd8] sm:$0xff]
    %v184 = vld [vmem:[%s2 + $0xe0] sm:$0xff]
    %v185 = vld [vmem:[%s2 + $0xe8] sm:$0xff]
    %v186 = vld [vmem:[%s2 + $0xf0] sm:$0xff]
    %v187 = vld [vmem:[%s2 + $0xf8] sm:$0xff]
    %v188 = vadd.f32 %v124, %v156
    %v189 = vadd.f32 %v125, %v157
    %v190 = vadd.f32 %v126, %v158
    %v191 = vadd.f32 %v127, %v159
    %v192 = vadd.f32 %v128, %v160
    %v193 = vadd.f32 %v129, %v161
    %v194 = vadd.f32 %v130, %v162
    %v195 = vadd.f32 %v131, %v163
    %v196 = vadd.f32 %v132, %v164
    %v197 = vadd.f32 %v133, %v165
    %v198 = vadd.f32 %v134, %v166
    %v199 = vadd.f32 %v135, %v167
    %v200 = vadd.f32 %v136, %v168
    %v201 = vadd.f32 %v137, %v169
    %v202 = vadd.f32 %v138, %v170
    %v203 = vadd.f32 %v139, %v171
    %v204 = vadd.f32 %v140, %v172
    %v205 = vadd.f32 %v141, %v173
    %v206 = vadd.f32 %v142, %v174
    %v207 = vadd.f32 %v143, %v175
    %v208 = vadd.f32 %v144, %v176
    %v209 = vadd.f32 %v145, %v177
    %v210 = vadd.f32 %v146, %v178
    %v211 = vadd.f32 %v147, %v179
    %v212 = vadd.f32 %v148, %v180
    %v213 = vadd.f32 %v149, %v181
    %v214 = vadd.f32 %v150, %v182
    %v215 = vadd.f32 %v151, %v183
    %v216 = vadd.f32 %v152, %v184
    %v217 = vadd.f32 %v153, %v185
    %v218 = vadd.f32 %v154, %v186
    %v219 = vadd.f32 %v155, %v187
    %v220 = vmax.f32 %v188, 0.0
    %v221 = vmax.f32 %v189, 0.0
    %v222 = vmax.f32 %v190, 0.0
    %v223 = vmax.f32 %v191, 0.0
    %v224 = vmax.f32 %v192, 0.0
    %v225 = vmax.f32 %v193, 0.0
    %v226 = vmax.f32 %v194, 0.0
    %v227 = vmax.f32 %v195, 0.0
    %v228 = vmax.f32 %v196, 0.0
    %v229 = vmax.f32 %v197, 0.0
    %v230 = vmax.f32 %v198, 0.0
    %v231 = vmax.f32 %v199, 0.0
    %v232 = vmax.f32 %v200, 0.0
    %v233 = vmax.f32 %v201, 0.0
    %v234 = vmax.f32 %v202, 0.0
    %v235 = vmax.f32 %v203, 0.0
    %v236 = vmax.f32 %v204, 0.0
    %v237 = vmax.f32 %v205, 0.0
    %v238 = vmax.f32 %v206, 0.0
    %v239 = vmax.f32 %v207, 0.0
    %v240 = vmax.f32 %v208, 0.0
    %v241 = vmax.f32 %v209, 0.0
    %v242 = vmax.f32 %v210, 0.0
    %v243 = vmax.f32 %v211, 0.0
    %v244 = vmax.f32 %v212, 0.0
    %v245 = vmax.f32 %v213, 0.0
    %v246 = vmax.f32 %v214, 0.0
    %v247 = vmax.f32 %v215, 0.0
    %v248 = vmax.f32 %v216, 0.0
    %v249 = vmax.f32 %v217, 0.0
    %v250 = vmax.f32 %v218, 0.0
    %v251 = vmax.f32 %v219, 0.0
    %v252 = vld [vmem:[%s3] sm:$0xff]
    %v253 = vld [vmem:[%s4] sm:$0x1]
    %v255 = vlaneseq
    %v256 = vshrl.u32 %v255, 7
    %v257 = vsub.s32 0, %v256
    %v258 = vrot.slane %v253, %v257
    %vm260 = vcmask 64512
    %v262 = vsel %vm260, %v220, 0
    %v265 = vsel %vm260, %v221, 0
    %v268 = vsel %vm260, %v222, 0
    %v271 = vsel %vm260, %v223, 0
    %v274 = vsel %vm260, %v224, 0
    %v277 = vsel %vm260, %v225, 0
    %v280 = vsel %vm260, %v226, 0
    %v283 = vsel %vm260, %v227, 0
    %v286 = vsel %vm260, %v228, 0
    %v289 = vsel %vm260, %v229, 0
    %v292 = vsel %vm260, %v230, 0
    %v295 = vsel %vm260, %v231, 0
    %v298 = vsel %vm260, %v232, 0
    %v301 = vsel %vm260, %v233, 0
    %v304 = vsel %vm260, %v234, 0
    %v307 = vsel %vm260, %v235, 0
    %v310 = vsel %vm260, %v236, 0
    %v313 = vsel %vm260, %v237, 0
    %v316 = vsel %vm260, %v238, 0
    %v319 = vsel %vm260, %v239, 0
    %v322 = vsel %vm260, %v240, 0
    %v325 = vsel %vm260, %v241, 0
    %v328 = vsel %vm260, %v242, 0
    %v331 = vsel %vm260, %v243, 0
    %v334 = vsel %vm260, %v244, 0
    %v337 = vsel %vm260, %v245, 0
    %v340 = vsel %vm260, %v246, 0
    %v343 = vsel %vm260, %v247, 0
    %v346 = vsel %vm260, %v248, 0
    %v349 = vsel %vm260, %v249, 0
    %v352 = vsel %vm260, %v250, 0
    %v355 = vsel %vm260, %v251, 0
    %357 = vmatprep.subr.mxu0 0.0
    %358 = vmatpush1.msra.mxu0 %v252
    %359 = vmatprep.subr.mxu0 0.0
    %360 = vmatpush1.msra.mxu0 0.0
    %361 = vmatprep.subr.mxu0 0.0
    %362 = vmatpush1.msra.mxu0 0.0
    %363 = vmatprep.subr.mxu0 0.0
    %364 = vmatpush1.msra.mxu0 0.0
    %365 = vmatprep.subr.mxu0 0.0
    %366 = vmatpush1.msra.mxu0 0.0
    %367 = vmatprep.subr.mxu0 0.0
    %368 = vmatpush1.msra.mxu0 0.0
    %369 = vmatprep.subr.mxu0 0.0
    %370 = vmatpush1.msra.mxu0 0.0
    %371 = vmatprep.subr.mxu0 0.0
    %372 = vmatpush1.msra.mxu0 0.0
    %373 = vmatprep.subr.mxu0 0.0
    %374 = vmatpush1.msra.mxu0 0.0
    %375 = vmatprep.subr.mxu0 0.0
    %376 = vmatpush1.msra.mxu0 0.0
    %377 = vmatprep.subr.mxu0 0.0
    %378 = vmatpush1.msra.mxu0 0.0
    %379 = vmatprep.subr.mxu0 0.0
    %380 = vmatpush1.msra.mxu0 0.0
    %381 = vmatprep.subr.mxu0 0.0
    %382 = vmatpush1.msra.mxu0 0.0
    %383 = vmatprep.subr.mxu0 0.0
    %384 = vmatpush1.msra.mxu0 0.0
    %385 = vmatprep.subr.mxu0 0.0
    %386 = vmatpush1.msra.mxu0 0.0
    %387 = vmatprep.subr.mxu0 0.0
    %388 = vmatpush1.msra.mxu0 0.0
    %389 = vmatprep.subr.mxu0 0.0
    %390 = vmatpush1.msra.mxu0 0.0
    %391 = vmatprep.subr.mxu0 0.0
    %392 = vmatpush1.msra.mxu0 0.0
    %393 = vmatprep.subr.mxu0 0.0
    %394 = vmatpush1.msra.mxu0 0.0
    %395 = vmatprep.subr.mxu0 0.0
    %396 = vmatpush1.msra.mxu0 0.0
    %397 = vmatprep.subr.mxu0 0.0
    %398 = vmatpush1.msra.mxu0 0.0
    %399 = vmatprep.subr.mxu0 0.0
    %400 = vmatpush1.msra.mxu0 0.0
    %401 = vmatprep.subr.mxu0 0.0
    %402 = vmatpush1.msra.mxu0 0.0
    %403 = vmatprep.subr.mxu0 0.0
    %404 = vmatpush1.msra.mxu0 0.0
    %405 = vmatprep.subr.mxu0 0.0
    %406 = vmatpush1.msra.mxu0 0.0
    %407 = vmatprep.subr.mxu0 0.0
    %408 = vmatpush1.msra.mxu0 0.0
    %409 = vmatprep.subr.mxu0 0.0
    %410 = vmatpush1.msra.mxu0 0.0
    %411 = vmatprep.subr.mxu0 0.0
    %412 = vmatpush1.msra.mxu0 0.0
    %413 = vmatprep.subr.mxu0 0.0
    %414 = vmatpush1.msra.mxu0 0.0
    %415 = vmatprep.subr.mxu0 0.0
    %416 = vmatpush1.msra.mxu0 0.0
    %417 = vmatprep.subr.mxu0 0.0
    %418 = vmatpush1.msra.mxu0 0.0
    %419 = vmatprep.subr.mxu0 0.0
    %420 = vmatpush1.msra.mxu0 0.0
    %421 = vmatprep.mubr.f32.mxu0 0.0
    %422 = vmatmul.mubr.f32.gmra.mrb[0].mxu0 %v262
    %v423 = vpop.f32.mrb[0].mxu0
    %v424 = vadd.f32 %v258, %v423
    %v425 = vpop.f32.mrb[0].mxu0
    %426 = vmatprep.mubr.f32.mxu0 0.0
    %427 = vmatmul.mubr.f32.gmra.mrb[0].mxu0 %v265
    %v428 = vpop.f32.mrb[0].mxu0
    %v429 = vadd.f32 %v258, %v428
    %v430 = vpop.f32.mrb[0].mxu0
    %431 = vmatprep.mubr.f32.mxu0 0.0
    %432 = vmatmul.mubr.f32.gmra.mrb[0].mxu0 %v268
    %v433 = vpop.f32.mrb[0].mxu0
    %v434 = vadd.f32 %v258, %v433
    %v435 = vpop.f32.mrb[0].mxu0
    %436 = vmatprep.mubr.f32.mxu0 0.0
    %437 = vmatmul.mubr.f32.gmra.mrb[0].mxu0 %v271
    %v438 = vpop.f32.mrb[0].mxu0
    %v439 = vadd.f32 %v258, %v438
    %v440 = vpop.f32.mrb[0].mxu0
    %441 = vmatprep.mubr.f32.mxu0 0.0
    %442 = vmatmul.mubr.f32.gmra.mrb[0].mxu0 %v274
    %v443 = vpop.f32.mrb[0].mxu0
    %v444 = vadd.f32 %v258, %v443
    %v445 = vpop.f32.mrb[0].mxu0
    %446 = vmatprep.mubr.f32.mxu0 0.0
    %447 = vmatmul.mubr.f32.gmra.mrb[0].mxu0 %v277
    %v448 = vpop.f32.mrb[0].mxu0
    %v449 = vadd.f32 %v258, %v448
    %v450 = vpop.f32.mrb[0].mxu0
    %451 = vmatprep.mubr.f32.mxu0 0.0
    %452 = vmatmul.mubr.f32.gmra.mrb[0].mxu0 %v280
    %v453 = vpop.f32.mrb[0].mxu0
    %v454 = vadd.f32 %v258, %v453
    %v455 = vpop.f32.mrb[0].mxu0
    %456 = vmatprep.mubr.f32.mxu0 0.0
    %457 = vmatmul.mubr.f32.gmra.mrb[0].mxu0 %v283
    %v458 = vpop.f32.mrb[0].mxu0
    %v459 = vadd.f32 %v258, %v458
    %v460 = vpop.f32.mrb[0].mxu0
    %461 = vmatprep.mubr.f32.mxu0 0.0
    %462 = vmatmul.mubr.f32.gmra.mrb[0].mxu0 %v286
    %v463 = vpop.f32.mrb[0].mxu0
    %v464 = vadd.f32 %v258, %v463
    %v465 = vpop.f32.mrb[0].mxu0
    %466 = vmatprep.mubr.f32.mxu0 0.0
    %467 = vmatmul.mubr.f32.gmra.mrb[0].mxu0 %v289
    %v468 = vpop.f32.mrb[0].mxu0
    %v469 = vadd.f32 %v258, %v468
    %v470 = vpop.f32.mrb[0].mxu0
    %471 = vmatprep.mubr.f32.mxu0 0.0
    %472 = vmatmul.mubr.f32.gmra.mrb[0].mxu0 %v292
    %v473 = vpop.f32.mrb[0].mxu0
    %v474 = vadd.f32 %v258, %v473
    %v475 = vpop.f32.mrb[0].mxu0
    %476 = vmatprep.mubr.f32.mxu0 0.0
    %477 = vmatmul.mubr.f32.gmra.mrb[0].mxu0 %v295
    %v478 = vpop.f32.mrb[0].mxu0
    %v479 = vadd.f32 %v258, %v478
    %v480 = vpop.f32.mrb[0].mxu0
    %481 = vmatprep.mubr.f32.mxu0 0.0
    %482 = vmatmul.mubr.f32.gmra.mrb[0].mxu0 %v298
    %v483 = vpop.f32.mrb[0].mxu0
    %v484 = vadd.f32 %v258, %v483
    %v485 = vpop.f32.mrb[0].mxu0
    %486 = vmatprep.mubr.f32.mxu0 0.0
    %487 = vmatmul.mubr.f32.gmra.mrb[0].mxu0 %v301
    %v488 = vpop.f32.mrb[0].mxu0
    %v489 = vadd.f32 %v258, %v488
    %v490 = vpop.f32.mrb[0].mxu0
    %491 = vmatprep.mubr.f32.mxu0 0.0
    %492 = vmatmul.mubr.f32.gmra.mrb[0].mxu0 %v304
    %v493 = vpop.f32.mrb[0].mxu0
    %v494 = vadd.f32 %v258, %v493
    %v495 = vpop.f32.mrb[0].mxu0
    %496 = vmatprep.mubr.f32.mxu0 0.0
    %497 = vmatmul.mubr.f32.gmra.mrb[0].mxu0 %v307
    %v498 = vpop.f32.mrb[0].mxu0
    %v499 = vadd.f32 %v258, %v498
    %v500 = vpop.f32.mrb[0].mxu0
    %501 = vmatprep.mubr.f32.mxu0 0.0
    %502 = vmatmul.mubr.f32.gmra.mrb[0].mxu0 %v310
    %v503 = vpop.f32.mrb[0].mxu0
    %v504 = vadd.f32 %v258, %v503
    %v505 = vpop.f32.mrb[0].mxu0
    %506 = vmatprep.mubr.f32.mxu0 0.0
    %507 = vmatmul.mubr.f32.gmra.mrb[0].mxu0 %v313
    %v508 = vpop.f32.mrb[0].mxu0
    %v509 = vadd.f32 %v258, %v508
    %v510 = vpop.f32.mrb[0].mxu0
    %511 = vmatprep.mubr.f32.mxu0 0.0
    %512 = vmatmul.mubr.f32.gmra.mrb[0].mxu0 %v316
    %v513 = vpop.f32.mrb[0].mxu0
    %v514 = vadd.f32 %v258, %v513
    %v515 = vpop.f32.mrb[0].mxu0
    %516 = vmatprep.mubr.f32.mxu0 0.0
    %517 = vmatmul.mubr.f32.gmra.mrb[0].mxu0 %v319
    %v518 = vpop.f32.mrb[0].mxu0
    %v519 = vadd.f32 %v258, %v518
    %v520 = vpop.f32.mrb[0].mxu0
    %521 = vmatprep.mubr.f32.mxu0 0.0
    %522 = vmatmul.mubr.f32.gmra.mrb[0].mxu0 %v322
    %v523 = vpop.f32.mrb[0].mxu0
    %v524 = vadd.f32 %v258, %v523
    %v525 = vpop.f32.mrb[0].mxu0
    %526 = vmatprep.mubr.f32.mxu0 0.0
    %527 = vmatmul.mubr.f32.gmra.mrb[0].mxu0 %v325
    %v528 = vpop.f32.mrb[0].mxu0
    %v529 = vadd.f32 %v258, %v528
    %v530 = vpop.f32.mrb[0].mxu0
    %531 = vmatprep.mubr.f32.mxu0 0.0
    %532 = vmatmul.mubr.f32.gmra.mrb[0].mxu0 %v328
    %v533 = vpop.f32.mrb[0].mxu0
    %v534 = vadd.f32 %v258, %v533
    %v535 = vpop.f32.mrb[0].mxu0
    %536 = vmatprep.mubr.f32.mxu0 0.0
    %537 = vmatmul.mubr.f32.gmra.mrb[0].mxu0 %v331
    %v538 = vpop.f32.mrb[0].mxu0
    %v539 = vadd.f32 %v258, %v538
    %v540 = vpop.f32.mrb[0].mxu0
    %541 = vmatprep.mubr.f32.mxu0 0.0
    %542 = vmatmul.mubr.f32.gmra.mrb[0].mxu0 %v334
    %v543 = vpop.f32.mrb[0].mxu0
    %v544 = vadd.f32 %v258, %v543
    %v545 = vpop.f32.mrb[0].mxu0
    %546 = vmatprep.mubr.f32.mxu0 0.0
    %547 = vmatmul.mubr.f32.gmra.mrb[0].mxu0 %v337
    %v548 = vpop.f32.mrb[0].mxu0
    %v549 = vadd.f32 %v258, %v548
    %v550 = vpop.f32.mrb[0].mxu0
    %551 = vmatprep.mubr.f32.mxu0 0.0
    %552 = vmatmul.mubr.f32.gmra.mrb[0].mxu0 %v340
    %v553 = vpop.f32.mrb[0].mxu0
    %v554 = vadd.f32 %v258, %v553
    %v555 = vpop.f32.mrb[0].mxu0
    %556 = vmatprep.mubr.f32.mxu0 0.0
    %557 = vmatmul.mubr.f32.gmra.mrb[0].mxu0 %v343
    %v558 = vpop.f32.mrb[0].mxu0
    %v559 = vadd.f32 %v258, %v558
    %v560 = vpop.f32.mrb[0].mxu0
    %561 = vmatprep.mubr.f32.mxu0 0.0
    %562 = vmatmul.mubr.f32.gmra.mrb[0].mxu0 %v346
    %v563 = vpop.f32.mrb[0].mxu0
    %v564 = vadd.f32 %v258, %v563
    %v565 = vpop.f32.mrb[0].mxu0
    %566 = vmatprep.mubr.f32.mxu0 0.0
    %567 = vmatmul.mubr.f32.gmra.mrb[0].mxu0 %v349
    %v568 = vpop.f32.mrb[0].mxu0
    %v569 = vadd.f32 %v258, %v568
    %v570 = vpop.f32.mrb[0].mxu0
    %571 = vmatprep.mubr.f32.mxu0 0.0
    %572 = vmatmul.mubr.f32.gmra.mrb[0].mxu0 %v352
    %v573 = vpop.f32.mrb[0].mxu0
    %v574 = vadd.f32 %v258, %v573
    %v575 = vpop.f32.mrb[0].mxu0
    %576 = vmatprep.mubr.f32.mxu0 0.0
    %577 = vmatmul.mubr.f32.gmra.mrb[0].mxu0 %v355
    %v578 = vpop.f32.mrb[0].mxu0
    %v579 = vadd.f32 %v258, %v578
    %v580 = vpop.f32.mrb[0].mxu0
    %581 = vdwg.mxu0
    %v582 = vmax.f32 %v424, 0.0
    %v583 = vmax.f32 %v429, 0.0
    %v584 = vmax.f32 %v434, 0.0
    %v585 = vmax.f32 %v439, 0.0
    %v586 = vmax.f32 %v444, 0.0
    %v587 = vmax.f32 %v449, 0.0
    %v588 = vmax.f32 %v454, 0.0
    %v589 = vmax.f32 %v459, 0.0
    %v590 = vmax.f32 %v464, 0.0
    %v591 = vmax.f32 %v469, 0.0
    %v592 = vmax.f32 %v474, 0.0
    %v593 = vmax.f32 %v479, 0.0
    %v594 = vmax.f32 %v484, 0.0
    %v595 = vmax.f32 %v489, 0.0
    %v596 = vmax.f32 %v494, 0.0
    %v597 = vmax.f32 %v499, 0.0
    %v598 = vmax.f32 %v504, 0.0
    %v599 = vmax.f32 %v509, 0.0
    %v600 = vmax.f32 %v514, 0.0
    %v601 = vmax.f32 %v519, 0.0
    %v602 = vmax.f32 %v524, 0.0
    %v603 = vmax.f32 %v529, 0.0
    %v604 = vmax.f32 %v534, 0.0
    %v605 = vmax.f32 %v539, 0.0
    %v606 = vmax.f32 %v544, 0.0
    %v607 = vmax.f32 %v549, 0.0
    %v608 = vmax.f32 %v554, 0.0
    %v609 = vmax.f32 %v559, 0.0
    %v610 = vmax.f32 %v564, 0.0
    %v611 = vmax.f32 %v569, 0.0
    %v612 = vmax.f32 %v574, 0.0
    %v613 = vmax.f32 %v579, 0.0
    %v614 = vmax.f32 %v582, %v598
    %v615 = vmax.f32 %v583, %v599
    %v616 = vmax.f32 %v584, %v600
    %v617 = vmax.f32 %v585, %v601
    %v618 = vmax.f32 %v586, %v602
    %v619 = vmax.f32 %v587, %v603
    %v620 = vmax.f32 %v588, %v604
    %v621 = vmax.f32 %v589, %v605
    %v622 = vmax.f32 %v590, %v606
    %v623 = vmax.f32 %v591, %v607
    %v624 = vmax.f32 %v592, %v608
    %v625 = vmax.f32 %v593, %v609
    %v626 = vmax.f32 %v594, %v610
    %v627 = vmax.f32 %v595, %v611
    %v628 = vmax.f32 %v596, %v612
    %v629 = vmax.f32 %v597, %v613
    %630 = vst [vmem:[#allocation2] sm:$0xff] 0.0
    %631 = vst [vmem:[#allocation2 + $0x48] sm:$0xff] 0.0
    %632 = vst [vmem:[#allocation2 + $0x8] sm:$0xff] %v614
    %633 = vst [vmem:[#allocation2 + $0x10] sm:$0xff] %v615
    %634 = vst [vmem:[#allocation2 + $0x18] sm:$0xff] %v616
    %635 = vst [vmem:[#allocation2 + $0x20] sm:$0xff] %v617
    %636 = vst [vmem:[#allocation2 + $0x28] sm:$0xff] %v618
    %637 = vst [vmem:[#allocation2 + $0x30] sm:$0xff] %v619
    %638 = vst [vmem:[#allocation2 + $0x38] sm:$0xff] %v620
    %639 = vst [vmem:[#allocation2 + $0x40] sm:$0xff] %v621
    %640 = vst [vmem:[#allocation2 + $0x50] sm:$0xff] 0.0
    %641 = vst [vmem:[#allocation2 + $0x98] sm:$0xff] 0.0
    %642 = vst [vmem:[#allocation2 + $0x58] sm:$0xff] %v622
    %643 = vst [vmem:[#allocation2 + $0x60] sm:$0xff] %v623
    %644 = vst [vmem:[#allocation2 + $0x68] sm:$0xff] %v624
    %645 = vst [vmem:[#allocation2 + $0x70] sm:$0xff] %v625
    %646 = vst [vmem:[#allocation2 + $0x78] sm:$0xff] %v626
    %647 = vst [vmem:[#allocation2 + $0x80] sm:$0xff] %v627
    %648 = vst [vmem:[#allocation2 + $0x88] sm:$0xff] %v628
    %649 = vst [vmem:[#allocation2 + $0x90] sm:$0xff] %v629
    %v650 = vld [vmem:[#allocation2] sm:$0xff]
    %v651 = vld [vmem:[#allocation2 + $0x8] sm:$0xff]
    %v652 = vld [vmem:[#allocation2 + $0x10] sm:$0xff]
    %v653 = vld [vmem:[#allocation2 + $0x18] sm:$0xff]
    %v654 = vld [vmem:[#allocation2 + $0x20] sm:$0xff]
    %v655 = vld [vmem:[#allocation2 + $0x28] sm:$0xff]
    %v656 = vld [vmem:[#allocation2 + $0x30] sm:$0xff]
    %v657 = vld [vmem:[#allocation2 + $0x38] sm:$0xff]
    %v658 = vpack.c.bf16 %v651, %v650
    %v659 = vpack.c.bf16 %v653, %v652
    %v660 = vpack.c.bf16 %v655, %v654
    %v661 = vpack.c.bf16 %v657, %v656
    %662 = vst [vmem:[#allocation3] sm:$0xff] %v658
    %663 = vst [vmem:[#allocation3 + $0x28] sm:$0xff] %v659
    %664 = vst [vmem:[#allocation3 + $0x50] sm:$0xff] %v660
    %665 = vst [vmem:[#allocation3 + $0x78] sm:$0xff] %v661
    %v666 = vld [vmem:[#allocation2 + $0x50] sm:$0xff]
    %v667 = vld [vmem:[#allocation2 + $0x58] sm:$0xff]
    %v668 = vld [vmem:[#allocation2 + $0x60] sm:$0xff]
    %v669 = vld [vmem:[#allocation2 + $0x68] sm:$0xff]
    %v670 = vld [vmem:[#allocation2 + $0x70] sm:$0xff]
    %v671 = vld [vmem:[#allocation2 + $0x78] sm:$0xff]
    %v672 = vld [vmem:[#allocation2 + $0x80] sm:$0xff]
    %v673 = vld [vmem:[#allocation2 + $0x88] sm:$0xff]
    %v674 = vpack.c.bf16 %v667, %v666
    %v675 = vpack.c.bf16 %v669, %v668
    %v676 = vpack.c.bf16 %v671, %v670
    %v677 = vpack.c.bf16 %v673, %v672
    %678 = vst [vmem:[#allocation3 + $0x8] sm:$0xff] %v674
    %679 = vst [vmem:[#allocation3 + $0x30] sm:$0xff] %v675
    %680 = vst [vmem:[#allocation3 + $0x58] sm:$0xff] %v676
    %681 = vst [vmem:[#allocation3 + $0x80] sm:$0xff] %v677
    %v682 = vld [vmem:[#allocation2 + $0x8] sm:$0xff]
    %v683 = vld [vmem:[#allocation2 + $0x10] sm:$0xff]
    %v684 = vld [vmem:[#allocation2 + $0x18] sm:$0xff]
    %v685 = vld [vmem:[#allocation2 + $0x20] sm:$0xff]
    %v686 = vld [vmem:[#allocation2 + $0x28] sm:$0xff]
    %v687 = vld [vmem:[#allocation2 + $0x30] sm:$0xff]
    %v688 = vld [vmem:[#allocation2 + $0x38] sm:$0xff]
    %v689 = vld [vmem:[#allocation2 + $0x40] sm:$0xff]
    %v690 = vpack.c.bf16 %v683, %v682
    %v691 = vpack.c.bf16 %v685, %v684
    %v692 = vpack.c.bf16 %v687, %v686
    %v693 = vpack.c.bf16 %v689, %v688
    %694 = vst [vmem:[#allocation3 + $0x10] sm:$0xff] %v690
    %695 = vst [vmem:[#allocation3 + $0x38] sm:$0xff] %v691
    %696 = vst [vmem:[#allocation3 + $0x60] sm:$0xff] %v692
    %697 = vst [vmem:[#allocation3 + $0x88] sm:$0xff] %v693
    %v698 = vld [vmem:[#allocation2 + $0x58] sm:$0xff]
    %v699 = vld [vmem:[#allocation2 + $0x60] sm:$0xff]
    %v700 = vld [vmem:[#allocation2 + $0x68] sm:$0xff]
    %v701 = vld [vmem:[#allocation2 + $0x70] sm:$0xff]
    %v702 = vld [vmem:[#allocation2 + $0x78] sm:$0xff]
    %v703 = vld [vmem:[#allocation2 + $0x80] sm:$0xff]
    %v704 = vld [vmem:[#allocation2 + $0x88] sm:$0xff]
    %v705 = vld [vmem:[#allocation2 + $0x90] sm:$0xff]
    %v706 = vpack.c.bf16 %v699, %v698
    %v707 = vpack.c.bf16 %v701, %v700
    %v708 = vpack.c.bf16 %v703, %v702
    %v709 = vpack.c.bf16 %v705, %v704
    %710 = vst [vmem:[#allocation3 + $0x18] sm:$0xff] %v706
    %711 = vst [vmem:[#allocation3 + $0x40] sm:$0xff] %v707
    %712 = vst [vmem:[#allocation3 + $0x68] sm:$0xff] %v708
    %713 = vst [vmem:[#allocation3 + $0x90] sm:$0xff] %v709
    %v714 = vld [vmem:[#allocation2 + $0x10] sm:$0xff]
    %v715 = vld [vmem:[#allocation2 + $0x18] sm:$0xff]
    %v716 = vld [vmem:[#allocation2 + $0x20] sm:$0xff]
    %v717 = vld [vmem:[#allocation2 + $0x28] sm:$0xff]
    %v718 = vld [vmem:[#allocation2 + $0x30] sm:$0xff]
    %v719 = vld [vmem:[#allocation2 + $0x38] sm:$0xff]
    %v720 = vld [vmem:[#allocation2 + $0x40] sm:$0xff]
    %v721 = vld [vmem:[#allocation2 + $0x48] sm:$0xff]
    %v722 = vpack.c.bf16 %v715, %v714
    %v723 = vpack.c.bf16 %v717, %v716
    %v724 = vpack.c.bf16 %v719, %v718
    %v725 = vpack.c.bf16 %v721, %v720
    %726 = vst [vmem:[#allocation3 + $0x20] sm:$0xff] %v722
    %727 = vst [vmem:[#allocation3 + $0x48] sm:$0xff] %v723
    %728 = vst [vmem:[#allocation3 + $0x70] sm:$0xff] %v724
    %729 = vst [vmem:[#allocation3 + $0x98] sm:$0xff] %v725
    %v730 = vld [vmem:[#allocation2 + $0x50] sm:$0xff]
    %v731 = vld [vmem:[#allocation2 + $0x58] sm:$0xff]
    %v732 = vld [vmem:[#allocation2 + $0x60] sm:$0xff]
    %v733 = vld [vmem:[#allocation2 + $0x68] sm:$0xff]
    %v734 = vld [vmem:[#allocation2 + $0x70] sm:$0xff]
    %v735 = vld [vmem:[#allocation2 + $0x78] sm:$0xff]
    %v736 = vld [vmem:[#allocation2 + $0x80] sm:$0xff]
    %v737 = vld [vmem:[#allocation2 + $0x88] sm:$0xff]
    %v738 = vpack.c.bf16 %v731, %v730
    %v739 = vpack.c.bf16 %v733, %v732
    %v740 = vpack.c.bf16 %v735, %v734
    %v741 = vpack.c.bf16 %v737, %v736
    %742 = vst [vmem:[#allocation3 + $0xa0] sm:$0xff] %v738
    %743 = vst [vmem:[#allocation3 + $0xc8] sm:$0xff] %v739
    %744 = vst [vmem:[#allocation3 + $0xf0] sm:$0xff] %v740
    %745 = vst [vmem:[#allocation3 + $0x118] sm:$0xff] %v741
    %v746 = vld [vmem:[#allocation2 + $0x8] sm:$0xff]
    %v747 = vld [vmem:[#allocation2 + $0x10] sm:$0xff]
    %v748 = vld [vmem:[#allocation2 + $0x18] sm:$0xff]
    %v749 = vld [vmem:[#allocation2 + $0x20] sm:$0xff]
    %v750 = vld [vmem:[#allocation2 + $0x28] sm:$0xff]
    %v751 = vld [vmem:[#allocation2 + $0x30] sm:$0xff]
    %v752 = vld [vmem:[#allocation2 + $0x38] sm:$0xff]
    %v753 = vld [vmem:[#allocation2 + $0x40] sm:$0xff]
    %v754 = vpack.c.bf16 %v747, %v746
    %v755 = vpack.c.bf16 %v749, %v748
    %v756 = vpack.c.bf16 %v751, %v750
    %v757 = vpack.c.bf16 %v753, %v752
    %758 = vst [vmem:[#allocation3 + $0xa8] sm:$0xff] %v754
    %759 = vst [vmem:[#allocation3 + $0xd0] sm:$0xff] %v755
    %760 = vst [vmem:[#allocation3 + $0xf8] sm:$0xff] %v756
    %761 = vst [vmem:[#allocation3 + $0x120] sm:$0xff] %v757
    %v762 = vld [vmem:[#allocation2 + $0x58] sm:$0xff]
    %v763 = vld [vmem:[#allocation2 + $0x60] sm:$0xff]
    %v764 = vld [vmem:[#allocation2 + $0x68] sm:$0xff]
    %v765 = vld [vmem:[#allocation2 + $0x70] sm:$0xff]
    %v766 = vld [vmem:[#allocation2 + $0x78] sm:$0xff]
    %v767 = vld [vmem:[#allocation2 + $0x80] sm:$0xff]
    %v768 = vld [vmem:[#allocation2 + $0x88] sm:$0xff]
    %v769 = vld [vmem:[#allocation2 + $0x90] sm:$0xff]
    %v770 = vpack.c.bf16 %v763, %v762
    %v771 = vpack.c.bf16 %v765, %v764
    %v772 = vpack.c.bf16 %v767, %v766
    %v773 = vpack.c.bf16 %v769, %v768
    %774 = vst [vmem:[#allocation3 + $0xb0] sm:$0xff] %v770
    %775 = vst [vmem:[#allocation3 + $0xd8] sm:$0xff] %v771
    %776 = vst [vmem:[#allocation3 + $0x100] sm:$0xff] %v772
    %777 = vst [vmem:[#allocation3 + $0x128] sm:$0xff] %v773
    %v778 = vld [vmem:[#allocation2 + $0x10] sm:$0xff]
    %v779 = vld [vmem:[#allocation2 + $0x18] sm:$0xff]
    %v780 = vld [vmem:[#allocation2 + $0x20] sm:$0xff]
    %v781 = vld [vmem:[#allocation2 + $0x28] sm:$0xff]
    %v782 = vld [vmem:[#allocation2 + $0x30] sm:$0xff]
    %v783 = vld [vmem:[#allocation2 + $0x38] sm:$0xff]
    %v784 = vld [vmem:[#allocation2 + $0x40] sm:$0xff]
    %v785 = vld [vmem:[#allocation2 + $0x48] sm:$0xff]
    %v786 = vpack.c.bf16 %v779, %v778
    %v787 = vpack.c.bf16 %v781, %v780
    %v788 = vpack.c.bf16 %v783, %v782
    %v789 = vpack.c.bf16 %v785, %v784
    %790 = vst [vmem:[#allocation3 + $0xb8] sm:$0xff] %v786
    %791 = vst [vmem:[#allocation3 + $0xe0] sm:$0xff] %v787
    %792 = vst [vmem:[#allocation3 + $0x108] sm:$0xff] %v788
    %793 = vst [vmem:[#allocation3 + $0x130] sm:$0xff] %v789
    %v794 = vld [vmem:[#allocation2 + $0x60] sm:$0xff]
    %v795 = vld [vmem:[#allocation2 + $0x68] sm:$0xff]
    %v796 = vld [vmem:[#allocation2 + $0x70] sm:$0xff]
    %v797 = vld [vmem:[#allocation2 + $0x78] sm:$0xff]
    %v798 = vld [vmem:[#allocation2 + $0x80] sm:$0xff]
    %v799 = vld [vmem:[#allocation2 + $0x88] sm:$0xff]
    %v800 = vld [vmem:[#allocation2 + $0x90] sm:$0xff]
    %v801 = vld [vmem:[#allocation2 + $0x98] sm:$0xff]
    %v802 = vpack.c.bf16 %v795, %v794
    %v803 = vpack.c.bf16 %v797, %v796
    %v804 = vpack.c.bf16 %v799, %v798
    %v805 = vpack.c.bf16 %v801, %v800
    %806 = vst [vmem:[#allocation3 + $0xc0] sm:$0xff] %v802
    %807 = vst [vmem:[#allocation3 + $0xe8] sm:$0xff] %v803
    %808 = vst [vmem:[#allocation3 + $0x110] sm:$0xff] %v804
    %809 = vst [vmem:[#allocation3 + $0x138] sm:$0xff] %v805
    %v810 = vld [vmem:[#allocation3] sm:$0xff]
    %v811 = vld [vmem:[#allocation3 + $0x8] sm:$0xff]
    %v812 = vld [vmem:[#allocation3 + $0x10] sm:$0xff]
    %v813 = vld [vmem:[#allocation3 + $0x18] sm:$0xff]
    %v814 = vld [vmem:[#allocation3 + $0x20] sm:$0xff]
    %v815 = vld [vmem:[#allocation3 + $0x28] sm:$0xff]
    %v816 = vld [vmem:[#allocation3 + $0x30] sm:$0xff]
    %v817 = vld [vmem:[#allocation3 + $0x38] sm:$0xff]
    %v818 = vld [vmem:[#allocation3 + $0x40] sm:$0xff]
    %v819 = vld [vmem:[#allocation3 + $0x48] sm:$0xff]
    %v820 = vld [vmem:[#allocation3 + $0x50] sm:$0xff]
    %v821 = vld [vmem:[#allocation3 + $0x58] sm:$0xff]
    %v822 = vld [vmem:[#allocation3 + $0x60] sm:$0xff]
    %v823 = vld [vmem:[#allocation3 + $0x68] sm:$0xff]
    %v824 = vld [vmem:[#allocation3 + $0x70] sm:$0xff]
    %v825 = vld [vmem:[#allocation3 + $0x78] sm:$0xff]
    %v826 = vld [vmem:[#allocation3 + $0x80] sm:$0xff]
    %v827 = vld [vmem:[#allocation3 + $0x88] sm:$0xff]
    %v828 = vld [vmem:[#allocation3 + $0x90] sm:$0xff]
    %v829 = vld [vmem:[#allocation3 + $0x98] sm:$0xff]
    %v830 = vld [vmem:[#allocation3 + $0xa0] sm:$0xff]
    %v831 = vld [vmem:[#allocation3 + $0xa8] sm:$0xff]
    %v832 = vld [vmem:[#allocation3 + $0xb0] sm:$0xff]
    %v833 = vld [vmem:[#allocation3 + $0xb8] sm:$0xff]
    %v834 = vld [vmem:[#allocation3 + $0xc0] sm:$0xff]
    %v835 = vld [vmem:[#allocation3 + $0xc8] sm:$0xff]
    %v836 = vld [vmem:[#allocation3 + $0xd0] sm:$0xff]
    %v837 = vld [vmem:[#allocation3 + $0xd8] sm:$0xff]
    %v838 = vld [vmem:[#allocation3 + $0xe0] sm:$0xff]
    %v839 = vld [vmem:[#allocation3 + $0xe8] sm:$0xff]
    %v840 = vld [vmem:[#allocation3 + $0xf0] sm:$0xff]
    %v841 = vld [vmem:[#allocation3 + $0xf8] sm:$0xff]
    %v842 = vld [vmem:[#allocation3 + $0x100] sm:$0xff]
    %v843 = vld [vmem:[#allocation3 + $0x108] sm:$0xff]
    %v844 = vld [vmem:[#allocation3 + $0x110] sm:$0xff]
    %v845 = vld [vmem:[#allocation3 + $0x118] sm:$0xff]
    %v846 = vld [vmem:[#allocation3 + $0x120] sm:$0xff]
    %v847 = vld [vmem:[#allocation3 + $0x128] sm:$0xff]
    %v848 = vld [vmem:[#allocation3 + $0x130] sm:$0xff]
    %v849 = vld [vmem:[#allocation3 + $0x138] sm:$0xff]
    %v850 = vld [vmem:[%s5] sm:$0xf]
    %v851 = vld [vmem:[%s5 + $0x4] sm:$0xf]
    %v852 = vld [vmem:[%s5 + $0x8] sm:$0xf]
    %v853 = vld [vmem:[%s5 + $0xc] sm:$0xf]
    %v854 = vld [vmem:[%s5 + $0x10] sm:$0xf]
    %v855 = vld [vmem:[%s5 + $0x14] sm:$0xf]
    %v856 = vld [vmem:[%s5 + $0x18] sm:$0xf]
    %v857 = vld [vmem:[%s5 + $0x1c] sm:$0xf]
    %v858 = vld [vmem:[%s5 + $0x20] sm:$0xf]
    %v859 = vld [vmem:[%s5 + $0x24] sm:$0xf]
    %v860 = vld [vmem:[%s5 + $0x28] sm:$0xf]
    %v861 = vld [vmem:[%s5 + $0x2c] sm:$0xf]
    %v862 = vld [vmem:[%s5 + $0x30] sm:$0xf]
    %v863 = vld [vmem:[%s5 + $0x34] sm:$0xf]
    %v864 = vld [vmem:[%s5 + $0x38] sm:$0xf]
    %v865 = vld [vmem:[%s5 + $0x3c] sm:$0xf]
    %v866 = vld [vmem:[%s5 + $0x40] sm:$0xf]
    %v867 = vld [vmem:[%s5 + $0x44] sm:$0xf]
    %v868 = vld [vmem:[%s5 + $0x48] sm:$0xf]
    %v869 = vld [vmem:[%s5 + $0x4c] sm:$0xf]
    %v870 = vld [vmem:[%s5 + $0x50] sm:$0xf]
    %v871 = vld [vmem:[%s5 + $0x54] sm:$0xf]
    %v872 = vld [vmem:[%s5 + $0x58] sm:$0xf]
    %v873 = vld [vmem:[%s5 + $0x5c] sm:$0xf]
    %v874 = vld [vmem:[%s5 + $0x60] sm:$0xf]
    %v875 = vld [vmem:[%s5 + $0x64] sm:$0xf]
    %v876 = vld [vmem:[%s5 + $0x68] sm:$0xf]
    %v877 = vld [vmem:[%s5 + $0x6c] sm:$0xf]
    %v878 = vld [vmem:[%s5 + $0x70] sm:$0xf]
    %v879 = vld [vmem:[%s5 + $0x74] sm:$0xf]
    %v880 = vld [vmem:[%s5 + $0x78] sm:$0xf]
    %v881 = vld [vmem:[%s5 + $0x7c] sm:$0xf]
    %v882 = vld [vmem:[%s5 + $0x80] sm:$0xf]
    %v883 = vld [vmem:[%s5 + $0x84] sm:$0xf]
    %v884 = vld [vmem:[%s5 + $0x88] sm:$0xf]
    %v885 = vld [vmem:[%s5 + $0x8c] sm:$0xf]
    %v886 = vld [vmem:[%s5 + $0x90] sm:$0xf]
    %v887 = vld [vmem:[%s5 + $0x94] sm:$0xf]
    %v888 = vld [vmem:[%s5 + $0x98] sm:$0xf]
    %v889 = vld [vmem:[%s5 + $0x9c] sm:$0xf]
    %v890 = vld [vmem:[%s5 + $0xa0] sm:$0xf]
    %v891 = vld [vmem:[%s5 + $0xa4] sm:$0xf]
    %v892 = vld [vmem:[%s5 + $0xa8] sm:$0xf]
    %v893 = vld [vmem:[%s5 + $0xac] sm:$0xf]
    %v894 = vld [vmem:[%s5 + $0xb0] sm:$0xf]
    %v895 = vld [vmem:[%s5 + $0xb4] sm:$0xf]
    %v896 = vld [vmem:[%s5 + $0xb8] sm:$0xf]
    %v897 = vld [vmem:[%s5 + $0xbc] sm:$0xf]
    %v898 = vld [vmem:[%s5 + $0xc0] sm:$0xf]
    %v899 = vld [vmem:[%s5 + $0xc4] sm:$0xf]
    %v900 = vld [vmem:[%s5 + $0xc8] sm:$0xf]
    %v901 = vld [vmem:[%s5 + $0xcc] sm:$0xf]
    %v902 = vld [vmem:[%s5 + $0xd0] sm:$0xf]
    %v903 = vld [vmem:[%s5 + $0xd4] sm:$0xf]
    %v904 = vld [vmem:[%s5 + $0xd8] sm:$0xf]
    %v905 = vld [vmem:[%s5 + $0xdc] sm:$0xf]
    %v906 = vld [vmem:[%s5 + $0xe0] sm:$0xf]
    %v907 = vld [vmem:[%s5 + $0xe4] sm:$0xf]
    %v908 = vld [vmem:[%s5 + $0xe8] sm:$0xf]
    %v909 = vld [vmem:[%s5 + $0xec] sm:$0xf]
    %v910 = vld [vmem:[%s5 + $0xf0] sm:$0xf]
    %v911 = vld [vmem:[%s5 + $0xf4] sm:$0xf]
    %v912 = vld [vmem:[%s5 + $0xf8] sm:$0xf]
    %v913 = vld [vmem:[%s5 + $0xfc] sm:$0xf]
    %v914 = vld [vmem:[%s5 + $0x100] sm:$0xf]
    %v915 = vld [vmem:[%s5 + $0x104] sm:$0xf]
    %v916 = vld [vmem:[%s5 + $0x108] sm:$0xf]
    %v917 = vld [vmem:[%s5 + $0x10c] sm:$0xf]
    %v918 = vld [vmem:[%s5 + $0x110] sm:$0xf]
    %v919 = vld [vmem:[%s5 + $0x114] sm:$0xf]
    %v920 = vld [vmem:[%s5 + $0x118] sm:$0xf]
    %v921 = vld [vmem:[%s5 + $0x11c] sm:$0xf]
    %v922 = vld [vmem:[%s5 + $0x120] sm:$0xf]
    %v923 = vld [vmem:[%s5 + $0x124] sm:$0xf]
    %v924 = vld [vmem:[%s5 + $0x128] sm:$0xf]
    %v925 = vld [vmem:[%s5 + $0x12c] sm:$0xf]
    %v926 = vld [vmem:[%s5 + $0x130] sm:$0xf]
    %v927 = vld [vmem:[%s5 + $0x134] sm:$0xf]
    %v928 = vld [vmem:[%s5 + $0x138] sm:$0xf]
    %v929 = vld [vmem:[%s5 + $0x13c] sm:$0xf]
    %v930 = vld [vmem:[%s6] sm:$0x1]
    %v932 = vlaneseq
    %v933 = vshrl.u32 %v932, 7
    %v934 = vsub.s32 0, %v933
    %v935 = vrot.slane %v930, %v934
    %v1017 = vunpack.c.l.b16 %v850
    %v1018 = vunpack.c.l.b16 %v851
    %v1019 = vunpack.c.l.b16 %v852
    %v1020 = vunpack.c.l.b16 %v853
    %v1021 = vunpack.c.l.b16 %v854
    %v1022 = vunpack.c.l.b16 %v855
    %v1023 = vunpack.c.l.b16 %v856
    %v1024 = vunpack.c.l.b16 %v857
    %v1025 = vunpack.c.l.b16 %v858
    %v1026 = vunpack.c.l.b16 %v859
    %v1027 = vunpack.c.l.b16 %v860
    %v1028 = vunpack.c.l.b16 %v861
    %v1029 = vunpack.c.l.b16 %v862
    %v1030 = vunpack.c.l.b16 %v863
    %v1031 = vunpack.c.l.b16 %v864
    %v1032 = vunpack.c.l.b16 %v865
    %v1033 = vunpack.c.l.b16 %v866
    %v1034 = vunpack.c.l.b16 %v867
    %v1035 = vunpack.c.l.b16 %v868
    %v1036 = vunpack.c.l.b16 %v869
    %v1037 = vunpack.c.l.b16 %v870
    %v1038 = vunpack.c.l.b16 %v871
    %v1039 = vunpack.c.l.b16 %v872
    %v1040 = vunpack.c.l.b16 %v873
    %v1041 = vunpack.c.l.b16 %v874
    %v1042 = vunpack.c.l.b16 %v875
    %v1043 = vunpack.c.l.b16 %v876
    %v1044 = vunpack.c.l.b16 %v877
    %v1045 = vunpack.c.l.b16 %v878
    %v1046 = vunpack.c.l.b16 %v879
    %v1047 = vunpack.c.l.b16 %v880
    %v1048 = vunpack.c.l.b16 %v881
    %v1049 = vunpack.c.l.b16 %v882
    %v1050 = vunpack.c.l.b16 %v883
    %v1051 = vunpack.c.l.b16 %v884
    %v1052 = vunpack.c.l.b16 %v885
    %v1053 = vunpack.c.l.b16 %v886
    %v1054 = vunpack.c.l.b16 %v887
    %v1055 = vunpack.c.l.b16 %v888
    %v1056 = vunpack.c.l.b16 %v889
    %v1057 = vunpack.c.l.b16 %v890
    %v1058 = vunpack.c.l.b16 %v891
    %v1059 = vunpack.c.l.b16 %v892
    %v1060 = vunpack.c.l.b16 %v893
    %v1061 = vunpack.c.l.b16 %v894
    %v1062 = vunpack.c.l.b16 %v895
    %v1063 = vunpack.c.l.b16 %v896
    %v1064 = vunpack.c.l.b16 %v897
    %v1065 = vunpack.c.l.b16 %v898
    %v1066 = vunpack.c.l.b16 %v899
    %v1067 = vunpack.c.l.b16 %v900
    %v1068 = vunpack.c.l.b16 %v901
    %v1069 = vunpack.c.l.b16 %v902
    %v1070 = vunpack.c.l.b16 %v903
    %v1071 = vunpack.c.l.b16 %v904
    %v1072 = vunpack.c.l.b16 %v905
    %v1073 = vunpack.c.l.b16 %v906
    %v1074 = vunpack.c.l.b16 %v907
    %v1075 = vunpack.c.l.b16 %v908
    %v1076 = vunpack.c.l.b16 %v909
    %v1077 = vunpack.c.l.b16 %v910
    %v1078 = vunpack.c.l.b16 %v911
    %v1079 = vunpack.c.l.b16 %v912
    %v1080 = vunpack.c.l.b16 %v913
    %v1081 = vunpack.c.l.b16 %v914
    %v1082 = vunpack.c.l.b16 %v915
    %v1083 = vunpack.c.l.b16 %v916
    %v1084 = vunpack.c.l.b16 %v917
    %v1085 = vunpack.c.l.b16 %v918
    %v1086 = vunpack.c.l.b16 %v919
    %v1087 = vunpack.c.l.b16 %v920
    %v1088 = vunpack.c.l.b16 %v921
    %v1089 = vunpack.c.l.b16 %v922
    %v1090 = vunpack.c.l.b16 %v923
    %v1091 = vunpack.c.l.b16 %v924
    %v1092 = vunpack.c.l.b16 %v925
    %v1093 = vunpack.c.l.b16 %v926
    %v1094 = vunpack.c.l.b16 %v927
    %v1095 = vunpack.c.l.b16 %v928
    %v1096 = vunpack.c.l.b16 %v929
    %v1097 = vpack.c.b16 %v1018, %v1017
    %v1098 = vpack.c.b16 %v1020, %v1019
    %v1099 = vpack.c.b16 %v1022, %v1021
    %v1100 = vpack.c.b16 %v1024, %v1023
    %v1101 = vpack.c.b16 %v1026, %v1025
    %v1102 = vpack.c.b16 %v1028, %v1027
    %v1103 = vpack.c.b16 %v1030, %v1029
    %v1104 = vpack.c.b16 %v1032, %v1031
    %v1105 = vpack.c.b16 %v1034, %v1033
    %v1106 = vpack.c.b16 %v1036, %v1035
    %v1107 = vpack.c.b16 %v1038, %v1037
    %v1108 = vpack.c.b16 %v1040, %v1039
    %v1109 = vpack.c.b16 %v1042, %v1041
    %v1110 = vpack.c.b16 %v1044, %v1043
    %v1111 = vpack.c.b16 %v1046, %v1045
    %v1112 = vpack.c.b16 %v1048, %v1047
    %v1113 = vpack.c.b16 %v1050, %v1049
    %v1114 = vpack.c.b16 %v1052, %v1051
    %v1115 = vpack.c.b16 %v1054, %v1053
    %v1116 = vpack.c.b16 %v1056, %v1055
    %v1117 = vpack.c.b16 %v1058, %v1057
    %v1118 = vpack.c.b16 %v1060, %v1059
    %v1119 = vpack.c.b16 %v1062, %v1061
    %v1120 = vpack.c.b16 %v1064, %v1063
    %v1121 = vpack.c.b16 %v1066, %v1065
    %v1122 = vpack.c.b16 %v1068, %v1067
    %v1123 = vpack.c.b16 %v1070, %v1069
    %v1124 = vpack.c.b16 %v1072, %v1071
    %v1125 = vpack.c.b16 %v1074, %v1073
    %v1126 = vpack.c.b16 %v1076, %v1075
    %v1127 = vpack.c.b16 %v1078, %v1077
    %v1128 = vpack.c.b16 %v1080, %v1079
    %v1129 = vpack.c.b16 %v1082, %v1081
    %v1130 = vpack.c.b16 %v1084, %v1083
    %v1131 = vpack.c.b16 %v1086, %v1085
    %v1132 = vpack.c.b16 %v1088, %v1087
    %v1133 = vpack.c.b16 %v1090, %v1089
    %v1134 = vpack.c.b16 %v1092, %v1091
    %v1135 = vpack.c.b16 %v1094, %v1093
    %v1136 = vpack.c.b16 %v1096, %v1095
    %1177 = vmatprep.subr.bf16.mxu0 0
    %1178 = vmatpush1.bf16.msra.mxu0 %v1097
    %1179 = vmatprep.subr.bf16.mxu0 0
    %1180 = vmatpush1.bf16.msra.mxu0 %v1098
    %1181 = vmatprep.subr.bf16.mxu0 0
    %1182 = vmatpush1.bf16.msra.mxu0 %v1099
    %1183 = vmatprep.subr.bf16.mxu0 0
    %1184 = vmatpush1.bf16.msra.mxu0 %v1100
    %1185 = vmatprep.subr.bf16.mxu0 0
    %1186 = vmatpush1.bf16.msra.mxu0 %v1101
    %1187 = vmatprep.subr.bf16.mxu0 0
    %1188 = vmatpush1.bf16.msra.mxu0 %v1102
    %1189 = vmatprep.subr.bf16.mxu0 0
    %1190 = vmatpush1.bf16.msra.mxu0 %v1103
    %1191 = vmatprep.subr.bf16.mxu0 0
    %1192 = vmatpush1.bf16.msra.mxu0 %v1104
    %1193 = vmatprep.subr.bf16.mxu0 0
    %1194 = vmatpush1.bf16.msra.mxu0 %v1105
    %1195 = vmatprep.subr.bf16.mxu0 0
    %1196 = vmatpush1.bf16.msra.mxu0 %v1106
    %1197 = vmatprep.subr.bf16.mxu0 0
    %1198 = vmatpush1.bf16.msra.mxu0 %v1107
    %1199 = vmatprep.subr.bf16.mxu0 0
    %1200 = vmatpush1.bf16.msra.mxu0 %v1108
    %1201 = vmatprep.subr.bf16.mxu0 0
    %1202 = vmatpush1.bf16.msra.mxu0 %v1109
    %1203 = vmatprep.subr.bf16.mxu0 0
    %1204 = vmatpush1.bf16.msra.mxu0 %v1110
    %1205 = vmatprep.subr.bf16.mxu0 0
    %1206 = vmatpush1.bf16.msra.mxu0 %v1111
    %1207 = vmatprep.subr.bf16.mxu0 0
    %1208 = vmatpush1.bf16.msra.mxu0 %v1112
    %1209 = vmatprep.mubr.bf16.mxu0 %v811
    %1210 = vmatmul.mubr.bf16.gmra.mrb[0].mxu0 %v810
    %v1211 = vpop.f32.mrb[0].mxu0
    %v1212 = vadd.f32 %v935, %v1211
    %v1213 = vpop.f32.mrb[0].mxu0
    %v1214 = vpop.f32.mrb[0].mxu0
    %v1215 = vadd.f32 %v935, %v1214
    %v1216 = vpop.f32.mrb[0].mxu0
    %1217 = vmatprep.mubr.bf16.mxu0 %v816
    %1218 = vmatmul.mubr.bf16.gmra.mrb[0].mxu0 %v815
    %v1219 = vpop.f32.mrb[0].mxu0
    %v1220 = vadd.f32 %v935, %v1219
    %v1221 = vpop.f32.mrb[0].mxu0
    %v1222 = vpop.f32.mrb[0].mxu0
    %v1223 = vadd.f32 %v935, %v1222
    %v1224 = vpop.f32.mrb[0].mxu0
    %1225 = vmatprep.mubr.bf16.mxu0 %v821
    %1226 = vmatmul.mubr.bf16.gmra.mrb[0].mxu0 %v820
    %v1227 = vpop.f32.mrb[0].mxu0
    %v1228 = vadd.f32 %v935, %v1227
    %v1229 = vpop.f32.mrb[0].mxu0
    %v1230 = vpop.f32.mrb[0].mxu0
    %v1231 = vadd.f32 %v935, %v1230
    %v1232 = vpop.f32.mrb[0].mxu0
    %1233 = vmatprep.mubr.bf16.mxu0 %v826
    %1234 = vmatmul.mubr.bf16.gmra.mrb[0].mxu0 %v825
    %v1235 = vpop.f32.mrb[0].mxu0
    %v1236 = vadd.f32 %v935, %v1235
    %v1237 = vpop.f32.mrb[0].mxu0
    %v1238 = vpop.f32.mrb[0].mxu0
    %v1239 = vadd.f32 %v935, %v1238
    %v1240 = vpop.f32.mrb[0].mxu0
    %1241 = vmatprep.mubr.bf16.mxu0 %v831
    %1242 = vmatmul.mubr.bf16.gmra.mrb[0].mxu0 %v830
    %v1243 = vpop.f32.mrb[0].mxu0
    %v1244 = vadd.f32 %v935, %v1243
    %v1245 = vpop.f32.mrb[0].mxu0
    %v1246 = vpop.f32.mrb[0].mxu0
    %v1247 = vadd.f32 %v935, %v1246
    %v1248 = vpop.f32.mrb[0].mxu0
    %1249 = vmatprep.mubr.bf16.mxu0 %v836
    %1250 = vmatmul.mubr.bf16.gmra.mrb[0].mxu0 %v835
    %v1251 = vpop.f32.mrb[0].mxu0
    %v1252 = vadd.f32 %v935, %v1251
    %v1253 = vpop.f32.mrb[0].mxu0
    %v1254 = vpop.f32.mrb[0].mxu0
    %v1255 = vadd.f32 %v935, %v1254
    %v1256 = vpop.f32.mrb[0].mxu0
    %1257 = vmatprep.mubr.bf16.mxu0 %v841
    %1258 = vmatmul.mubr.bf16.gmra.mrb[0].mxu0 %v840
    %v1259 = vpop.f32.mrb[0].mxu0
    %v1260 = vadd.f32 %v935, %v1259
    %v1261 = vpop.f32.mrb[0].mxu0
    %v1262 = vpop.f32.mrb[0].mxu0
    %v1263 = vadd.f32 %v935, %v1262
    %v1264 = vpop.f32.mrb[0].mxu0
    %1265 = vmatprep.mubr.bf16.mxu0 %v846
    %1266 = vmatmul.mubr.bf16.gmra.mrb[0].mxu0 %v845
    %v1267 = vpop.f32.mrb[0].mxu0
    %v1268 = vadd.f32 %v935, %v1267
    %v1269 = vpop.f32.mrb[0].mxu0
    %v1270 = vpop.f32.mrb[0].mxu0
    %v1271 = vadd.f32 %v935, %v1270
    %v1272 = vpop.f32.mrb[0].mxu0
    %1273 = vdwg.mxu0
    %1274 = vmatprep.subr.bf16.mxu0 0
    %1275 = vmatpush1.bf16.msra.mxu0 %v1113
    %1276 = vmatprep.subr.bf16.mxu0 0
    %1277 = vmatpush1.bf16.msra.mxu0 %v1114
    %1278 = vmatprep.subr.bf16.mxu0 0
    %1279 = vmatpush1.bf16.msra.mxu0 %v1115
    %1280 = vmatprep.subr.bf16.mxu0 0
    %1281 = vmatpush1.bf16.msra.mxu0 %v1116
    %1282 = vmatprep.subr.bf16.mxu0 0
    %1283 = vmatpush1.bf16.msra.mxu0 %v1117
    %1284 = vmatprep.subr.bf16.mxu0 0
    %1285 = vmatpush1.bf16.msra.mxu0 %v1118
    %1286 = vmatprep.subr.bf16.mxu0 0
    %1287 = vmatpush1.bf16.msra.mxu0 %v1119
    %1288 = vmatprep.subr.bf16.mxu0 0
    %1289 = vmatpush1.bf16.msra.mxu0 %v1120
    %1290 = vmatprep.subr.bf16.mxu0 0
    %1291 = vmatpush1.bf16.msra.mxu0 %v1121
    %1292 = vmatprep.subr.bf16.mxu0 0
    %1293 = vmatpush1.bf16.msra.mxu0 %v1122
    %1294 = vmatprep.subr.bf16.mxu0 0
    %1295 = vmatpush1.bf16.msra.mxu0 %v1123
    %1296 = vmatprep.subr.bf16.mxu0 0
    %1297 = vmatpush1.bf16.msra.mxu0 %v1124
    %1298 = vmatprep.subr.bf16.mxu0 0
    %1299 = vmatpush1.bf16.msra.mxu0 %v1125
    %1300 = vmatprep.subr.bf16.mxu0 0
    %1301 = vmatpush1.bf16.msra.mxu0 %v1126
    %1302 = vmatprep.subr.bf16.mxu0 0
    %1303 = vmatpush1.bf16.msra.mxu0 %v1127
    %1304 = vmatprep.subr.bf16.mxu0 0
    %1305 = vmatpush1.bf16.msra.mxu0 %v1128
    %1306 = vmatprep.mubr.bf16.mxu0 %v813
    %1307 = vmatmul.mubr.bf16.gmra.mrb[0].mxu0 %v812
    %v1308 = vpop.f32.mrb[0].mxu0
    %v1309 = vadd.f32 %v1212, %v1308
    %v1310 = vpop.f32.mrb[0].mxu0
    %v1311 = vpop.f32.mrb[0].mxu0
    %v1312 = vadd.f32 %v1215, %v1311
    %v1313 = vpop.f32.mrb[0].mxu0
    %1314 = vmatprep.mubr.bf16.mxu0 %v818
    %1315 = vmatmul.mubr.bf16.gmra.mrb[0].mxu0 %v817
    %v1316 = vpop.f32.mrb[0].mxu0
    %v1317 = vadd.f32 %v1220, %v1316
    %v1318 = vpop.f32.mrb[0].mxu0
    %v1319 = vpop.f32.mrb[0].mxu0
    %v1320 = vadd.f32 %v1223, %v1319
    %v1321 = vpop.f32.mrb[0].mxu0
    %1322 = vmatprep.mubr.bf16.mxu0 %v823
    %1323 = vmatmul.mubr.bf16.gmra.mrb[0].mxu0 %v822
    %v1324 = vpop.f32.mrb[0].mxu0
    %v1325 = vadd.f32 %v1228, %v1324
    %v1326 = vpop.f32.mrb[0].mxu0
    %v1327 = vpop.f32.mrb[0].mxu0
    %v1328 = vadd.f32 %v1231, %v1327
    %v1329 = vpop.f32.mrb[0].mxu0
    %1330 = vmatprep.mubr.bf16.mxu0 %v828
    %1331 = vmatmul.mubr.bf16.gmra.mrb[0].mxu0 %v827
    %v1332 = vpop.f32.mrb[0].mxu0
    %v1333 = vadd.f32 %v1236, %v1332
    %v1334 = vpop.f32.mrb[0].mxu0
    %v1335 = vpop.f32.mrb[0].mxu0
    %v1336 = vadd.f32 %v1239, %v1335
    %v1337 = vpop.f32.mrb[0].mxu0
    %1338 = vmatprep.mubr.bf16.mxu0 %v833
    %1339 = vmatmul.mubr.bf16.gmra.mrb[0].mxu0 %v832
    %v1340 = vpop.f32.mrb[0].mxu0
    %v1341 = vadd.f32 %v1244, %v1340
    %v1342 = vpop.f32.mrb[0].mxu0
    %v1343 = vpop.f32.mrb[0].mxu0
    %v1344 = vadd.f32 %v1247, %v1343
    %v1345 = vpop.f32.mrb[0].mxu0
    %1346 = vmatprep.mubr.bf16.mxu0 %v838
    %1347 = vmatmul.mubr.bf16.gmra.mrb[0].mxu0 %v837
    %v1348 = vpop.f32.mrb[0].mxu0
    %v1349 = vadd.f32 %v1252, %v1348
    %v1350 = vpop.f32.mrb[0].mxu0
    %v1351 = vpop.f32.mrb[0].mxu0
    %v1352 = vadd.f32 %v1255, %v1351
    %v1353 = vpop.f32.mrb[0].mxu0
    %1354 = vmatprep.mubr.bf16.mxu0 %v843
    %1355 = vmatmul.mubr.bf16.gmra.mrb[0].mxu0 %v842
    %v1356 = vpop.f32.mrb[0].mxu0
    %v1357 = vadd.f32 %v1260, %v1356
    %v1358 = vpop.f32.mrb[0].mxu0
    %v1359 = vpop.f32.mrb[0].mxu0
    %v1360 = vadd.f32 %v1263, %v1359
    %v1361 = vpop.f32.mrb[0].mxu0
    %1362 = vmatprep.mubr.bf16.mxu0 %v848
    %1363 = vmatmul.mubr.bf16.gmra.mrb[0].mxu0 %v847
    %v1364 = vpop.f32.mrb[0].mxu0
    %v1365 = vadd.f32 %v1268, %v1364
    %v1366 = vpop.f32.mrb[0].mxu0
    %v1367 = vpop.f32.mrb[0].mxu0
    %v1368 = vadd.f32 %v1271, %v1367
    %v1369 = vpop.f32.mrb[0].mxu0
    %1370 = vdwg.mxu0
    %1371 = vmatprep.subr.bf16.mxu0 0
    %1372 = vmatpush1.bf16.msra.mxu0 %v1129
    %1373 = vmatprep.subr.bf16.mxu0 0
    %1374 = vmatpush1.bf16.msra.mxu0 %v1130
    %1375 = vmatprep.subr.bf16.mxu0 0
    %1376 = vmatpush1.bf16.msra.mxu0 %v1131
    %1377 = vmatprep.subr.bf16.mxu0 0
    %1378 = vmatpush1.bf16.msra.mxu0 %v1132
    %1379 = vmatprep.subr.bf16.mxu0 0
    %1380 = vmatpush1.bf16.msra.mxu0 %v1133
    %1381 = vmatprep.subr.bf16.mxu0 0
    %1382 = vmatpush1.bf16.msra.mxu0 %v1134
    %1383 = vmatprep.subr.bf16.mxu0 0
    %1384 = vmatpush1.bf16.msra.mxu0 %v1135
    %1385 = vmatprep.subr.bf16.mxu0 0
    %1386 = vmatpush1.bf16.msra.mxu0 %v1136
    %1387 = vmatprep.subr.bf16.mxu0 0
    %1388 = vmatpush1.bf16.msra.mxu0 0
    %1389 = vmatprep.subr.bf16.mxu0 0
    %1390 = vmatpush1.bf16.msra.mxu0 0
    %1391 = vmatprep.subr.bf16.mxu0 0
    %1392 = vmatpush1.bf16.msra.mxu0 0
    %1393 = vmatprep.subr.bf16.mxu0 0
    %1394 = vmatpush1.bf16.msra.mxu0 0
    %1395 = vmatprep.subr.bf16.mxu0 0
    %1396 = vmatpush1.bf16.msra.mxu0 0
    %1397 = vmatprep.subr.bf16.mxu0 0
    %1398 = vmatpush1.bf16.msra.mxu0 0
    %1399 = vmatprep.subr.bf16.mxu0 0
    %1400 = vmatpush1.bf16.msra.mxu0 0
    %1401 = vmatprep.subr.bf16.mxu0 0
    %1402 = vmatpush1.bf16.msra.mxu0 0
    %1403 = vmatprep.mubr.bf16.mxu0 0
    %1404 = vmatmul.mubr.bf16.gmra.mrb[0].mxu0 %v814
    %v1405 = vpop.f32.mrb[0].mxu0
    %v1406 = vadd.f32 %v1309, %v1405
    %v1407 = vpop.f32.mrb[0].mxu0
    %v1408 = vpop.f32.mrb[0].mxu0
    %v1409 = vadd.f32 %v1312, %v1408
    %v1410 = vpop.f32.mrb[0].mxu0
    %1411 = vmatprep.mubr.bf16.mxu0 0
    %1412 = vmatmul.mubr.bf16.gmra.mrb[0].mxu0 %v819
    %v1413 = vpop.f32.mrb[0].mxu0
    %v1414 = vadd.f32 %v1317, %v1413
    %v1415 = vpop.f32.mrb[0].mxu0
    %v1416 = vpop.f32.mrb[0].mxu0
    %v1417 = vadd.f32 %v1320, %v1416
    %v1418 = vpop.f32.mrb[0].mxu0
    %1419 = vmatprep.mubr.bf16.mxu0 0
    %1420 = vmatmul.mubr.bf16.gmra.mrb[0].mxu0 %v824
    %v1421 = vpop.f32.mrb[0].mxu0
    %v1422 = vadd.f32 %v1325, %v1421
    %v1423 = vpop.f32.mrb[0].mxu0
    %v1424 = vpop.f32.mrb[0].mxu0
    %v1425 = vadd.f32 %v1328, %v1424
    %v1426 = vpop.f32.mrb[0].mxu0
    %1427 = vmatprep.mubr.bf16.mxu0 0
    %1428 = vmatmul.mubr.bf16.gmra.mrb[0].mxu0 %v829
    %v1429 = vpop.f32.mrb[0].mxu0
    %v1430 = vadd.f32 %v1333, %v1429
    %v1431 = vpop.f32.mrb[0].mxu0
    %v1432 = vpop.f32.mrb[0].mxu0
    %v1433 = vadd.f32 %v1336, %v1432
    %v1434 = vpop.f32.mrb[0].mxu0
    %1435 = vmatprep.mubr.bf16.mxu0 0
    %1436 = vmatmul.mubr.bf16.gmra.mrb[0].mxu0 %v834
    %v1437 = vpop.f32.mrb[0].mxu0
    %v1438 = vadd.f32 %v1341, %v1437
    %v1439 = vpop.f32.mrb[0].mxu0
    %v1440 = vpop.f32.mrb[0].mxu0
    %v1441 = vadd.f32 %v1344, %v1440
    %v1442 = vpop.f32.mrb[0].mxu0
    %1443 = vmatprep.mubr.bf16.mxu0 0
    %1444 = vmatmul.mubr.bf16.gmra.mrb[0].mxu0 %v839
    %v1445 = vpop.f32.mrb[0].mxu0
    %v1446 = vadd.f32 %v1349, %v1445
    %v1447 = vpop.f32.mrb[0].mxu0
    %v1448 = vpop.f32.mrb[0].mxu0
    %v1449 = vadd.f32 %v1352, %v1448
    %v1450 = vpop.f32.mrb[0].mxu0
    %1451 = vmatprep.mubr.bf16.mxu0 0
    %1452 = vmatmul.mubr.bf16.gmra.mrb[0].mxu0 %v844
    %v1453 = vpop.f32.mrb[0].mxu0
    %v1454 = vadd.f32 %v1357, %v1453
    %v1455 = vpop.f32.mrb[0].mxu0
    %v1456 = vpop.f32.mrb[0].mxu0
    %v1457 = vadd.f32 %v1360, %v1456
    %v1458 = vpop.f32.mrb[0].mxu0
    %1459 = vmatprep.mubr.bf16.mxu0 0
    %1460 = vmatmul.mubr.bf16.gmra.mrb[0].mxu0 %v849
    %v1461 = vpop.f32.mrb[0].mxu0
    %v1462 = vadd.f32 %v1365, %v1461
    %v1463 = vpop.f32.mrb[0].mxu0
    %v1464 = vpop.f32.mrb[0].mxu0
    %v1465 = vadd.f32 %v1368, %v1464
    %v1466 = vpop.f32.mrb[0].mxu0
    %1467 = vdwg.mxu0
    %v1468 = vmax.f32 %v1406, 0.0
    %v1469 = vmax.f32 %v1409, 0.0
    %v1470 = vmax.f32 %v1414, 0.0
    %v1471 = vmax.f32 %v1417, 0.0
    %v1472 = vmax.f32 %v1422, 0.0
    %v1473 = vmax.f32 %v1425, 0.0
    %v1474 = vmax.f32 %v1430, 0.0
    %v1475 = vmax.f32 %v1433, 0.0
    %v1476 = vmax.f32 %v1438, 0.0
    %v1477 = vmax.f32 %v1441, 0.0
    %v1478 = vmax.f32 %v1446, 0.0
    %v1479 = vmax.f32 %v1449, 0.0
    %v1480 = vmax.f32 %v1454, 0.0
    %v1481 = vmax.f32 %v1457, 0.0
    %v1482 = vmax.f32 %v1462, 0.0
    %v1483 = vmax.f32 %v1465, 0.0
    %v1484 = vmax.f32 %v1468, %v1476
    %v1485 = vmax.f32 %v1469, %v1477
    %v1486 = vmax.f32 %v1470, %v1478
    %v1487 = vmax.f32 %v1471, %v1479
    %v1488 = vmax.f32 %v1472, %v1480
    %v1489 = vmax.f32 %v1473, %v1481
    %v1490 = vmax.f32 %v1474, %v1482
    %v1491 = vmax.f32 %v1475, %v1483
    %1492 = vst [vmem:[#allocation4] sm:$0xff] %v1484
    %1493 = vst [vmem:[#allocation4 + $0x8] sm:$0xff] %v1485
    %1494 = vst [vmem:[#allocation4 + $0x10] sm:$0xff] %v1486
    %1495 = vst [vmem:[#allocation4 + $0x18] sm:$0xff] %v1487
    %1496 = vst [vmem:[#allocation4 + $0x20] sm:$0xff] %v1488
    %1497 = vst [vmem:[#allocation4 + $0x28] sm:$0xff] %v1489
    %1498 = vst [vmem:[#allocation4 + $0x30] sm:$0xff] %v1490
    %1499 = vst [vmem:[#allocation4 + $0x38] sm:$0xff] %v1491
    %v1500 = vld [vmem:[#allocation4] sm:$0xff]
    %v1501 = vld [vmem:[#allocation4 + $0x8] sm:$0xff]
    %v1502 = vld [vmem:[#allocation4 + $0x10] sm:$0xff]
    %v1503 = vld [vmem:[#allocation4 + $0x18] sm:$0xff]
    %v1504 = vld [vmem:[#allocation4 + $0x20] sm:$0xff]
    %v1505 = vld [vmem:[#allocation4 + $0x28] sm:$0xff]
    %v1506 = vld [vmem:[#allocation4 + $0x30] sm:$0xff]
    %v1507 = vld [vmem:[#allocation4 + $0x38] sm:$0xff]
    %v1508 = vpack.c.bf16 %v1500, %v1500
    %v1509 = vpack.c.bf16 %v1501, %v1501
    %v1510 = vpack.c.bf16 %v1502, %v1502
    %v1511 = vpack.c.bf16 %v1503, %v1503
    %v1512 = vpack.c.bf16 %v1504, %v1504
    %v1513 = vpack.c.bf16 %v1505, %v1505
    %v1514 = vpack.c.bf16 %v1506, %v1506
    %v1515 = vpack.c.bf16 %v1507, %v1507
    %v1516 = vld [vmem:[#allocation5] sm:$0xff]
    %v1517 = vld [vmem:[#allocation5 + $0x8] sm:$0xff]
    %v1518 = vld [vmem:[#allocation5 + $0x10] sm:$0xff]
    %v1519 = vld [vmem:[#allocation5 + $0x18] sm:$0xff]
    %v1520 = vld [vmem:[#allocation5 + $0x20] sm:$0xff]
    %v1521 = vld [vmem:[#allocation5 + $0x28] sm:$0xff]
    %v1522 = vld [vmem:[#allocation5 + $0x30] sm:$0xff]
    %v1523 = vld [vmem:[#allocation5 + $0x38] sm:$0xff]
    %v1524 = vld [vmem:[#allocation5 + $0x40] sm:$0xff]
    %v1525 = vld [vmem:[#allocation5 + $0x48] sm:$0xff]
    %v1526 = vld [vmem:[#allocation5 + $0x50] sm:$0xff]
    %v1527 = vld [vmem:[#allocation5 + $0x58] sm:$0xff]
    %v1528 = vld [vmem:[#allocation5 + $0x60] sm:$0xff]
    %v1529 = vld [vmem:[#allocation5 + $0x68] sm:$0xff]
    %v1530 = vld [vmem:[#allocation5 + $0x70] sm:$0xff]
    %v1531 = vld [vmem:[#allocation5 + $0x78] sm:$0xff]
    %v1532 = vld [vmem:[#allocation5 + $0x80] sm:$0xff]
    %v1533 = vld [vmem:[#allocation5 + $0x88] sm:$0xff]
    %v1534 = vld [vmem:[#allocation5 + $0x90] sm:$0xff]
    %v1535 = vld [vmem:[#allocation5 + $0x98] sm:$0xff]
    %v1536 = vld [vmem:[#allocation5 + $0xa0] sm:$0xff]
    %v1537 = vld [vmem:[#allocation5 + $0xa8] sm:$0xff]
    %v1538 = vld [vmem:[#allocation5 + $0xb0] sm:$0xff]
    %v1539 = vld [vmem:[#allocation5 + $0xb8] sm:$0xff]
    %v1540 = vld [vmem:[#allocation5 + $0xc0] sm:$0xff]
    %v1541 = vld [vmem:[#allocation5 + $0xc8] sm:$0xff]
    %v1542 = vld [vmem:[#allocation5 + $0xd0] sm:$0xff]
    %v1543 = vld [vmem:[#allocation5 + $0xd8] sm:$0xff]
    %v1544 = vld [vmem:[#allocation5 + $0xe0] sm:$0xff]
    %v1545 = vld [vmem:[#allocation5 + $0xe8] sm:$0xff]
    %v1546 = vld [vmem:[#allocation5 + $0xf0] sm:$0xff]
    %v1547 = vld [vmem:[#allocation5 + $0xf8] sm:$0xff]
    %v1548 = vld [vmem:[#allocation5 + $0x100] sm:$0xff]
    %v1549 = vld [vmem:[#allocation5 + $0x108] sm:$0xff]
    %v1550 = vld [vmem:[#allocation5 + $0x110] sm:$0xff]
    %v1551 = vld [vmem:[#allocation5 + $0x118] sm:$0xff]
    %v1552 = vld [vmem:[#allocation5 + $0x120] sm:$0xff]
    %v1553 = vld [vmem:[#allocation5 + $0x128] sm:$0xff]
    %v1554 = vld [vmem:[#allocation5 + $0x130] sm:$0xff]
    %v1555 = vld [vmem:[#allocation5 + $0x138] sm:$0xff]
    %v1556 = vld [vmem:[#allocation5 + $0x140] sm:$0xff]
    %v1557 = vld [vmem:[#allocation5 + $0x148] sm:$0xff]
    %v1558 = vld [vmem:[#allocation5 + $0x150] sm:$0xff]
    %v1559 = vld [vmem:[#allocation5 + $0x158] sm:$0xff]
    %v1560 = vld [vmem:[#allocation5 + $0x160] sm:$0xff]
    %v1561 = vld [vmem:[#allocation5 + $0x168] sm:$0xff]
    %v1562 = vld [vmem:[#allocation5 + $0x170] sm:$0xff]
    %v1563 = vld [vmem:[#allocation5 + $0x178] sm:$0xff]
    %v1564 = vld [vmem:[#allocation5 + $0x180] sm:$0xff]
    %v1565 = vld [vmem:[#allocation5 + $0x188] sm:$0xff]
    %v1566 = vld [vmem:[#allocation5 + $0x190] sm:$0xff]
    %v1567 = vld [vmem:[#allocation5 + $0x198] sm:$0xff]
    %v1568 = vld [vmem:[#allocation5 + $0x1a0] sm:$0xff]
    %v1569 = vld [vmem:[#allocation5 + $0x1a8] sm:$0xff]
    %v1570 = vld [vmem:[#allocation5 + $0x1b0] sm:$0xff]
    %v1571 = vld [vmem:[#allocation5 + $0x1b8] sm:$0xff]
    %v1572 = vld [vmem:[#allocation5 + $0x1c0] sm:$0xff]
    %v1573 = vld [vmem:[#allocation5 + $0x1c8] sm:$0xff]
    %v1574 = vld [vmem:[#allocation5 + $0x1d0] sm:$0xff]
    %v1575 = vld [vmem:[#allocation5 + $0x1d8] sm:$0xff]
    %v1576 = vld [vmem:[#allocation5 + $0x1e0] sm:$0xff]
    %v1577 = vld [vmem:[#allocation5 + $0x1e8] sm:$0xff]
    %v1578 = vld [vmem:[#allocation5 + $0x1f0] sm:$0xff]
    %v1579 = vld [vmem:[#allocation5 + $0x1f8] sm:$0xff]
    %v1580 = vld [vmem:[#allocation5 + $0x200] sm:$0xff]
    %v1581 = vld [vmem:[#allocation5 + $0x208] sm:$0xff]
    %v1582 = vld [vmem:[#allocation5 + $0x210] sm:$0xff]
    %v1583 = vld [vmem:[#allocation5 + $0x218] sm:$0xff]
    %v1584 = vld [vmem:[#allocation5 + $0x220] sm:$0xff]
    %v1585 = vld [vmem:[#allocation5 + $0x228] sm:$0xff]
    %v1586 = vld [vmem:[#allocation5 + $0x230] sm:$0xff]
    %v1587 = vld [vmem:[#allocation5 + $0x238] sm:$0xff]
    %v1588 = vld [vmem:[#allocation5 + $0x240] sm:$0xff]
    %v1589 = vld [vmem:[#allocation5 + $0x248] sm:$0xff]
    %v1590 = vld [vmem:[#allocation5 + $0x250] sm:$0xff]
    %v1591 = vld [vmem:[#allocation5 + $0x258] sm:$0xff]
    %v1592 = vld [vmem:[#allocation5 + $0x260] sm:$0xff]
    %v1593 = vld [vmem:[#allocation5 + $0x268] sm:$0xff]
    %v1594 = vld [vmem:[#allocation5 + $0x270] sm:$0xff]
    %v1595 = vld [vmem:[#allocation5 + $0x278] sm:$0xff]
    %v1596 = vld [vmem:[#allocation5 + $0x280] sm:$0xff]
    %v1597 = vld [vmem:[#allocation5 + $0x288] sm:$0xff]
    %v1598 = vld [vmem:[#allocation5 + $0x290] sm:$0xff]
    %v1599 = vld [vmem:[#allocation5 + $0x298] sm:$0xff]
    %v1600 = vld [vmem:[#allocation5 + $0x2a0] sm:$0xff]
    %v1601 = vld [vmem:[#allocation5 + $0x2a8] sm:$0xff]
    %v1602 = vld [vmem:[#allocation5 + $0x2b0] sm:$0xff]
    %v1603 = vld [vmem:[#allocation5 + $0x2b8] sm:$0xff]
    %v1604 = vld [vmem:[#allocation5 + $0x2c0] sm:$0xff]
    %v1605 = vld [vmem:[#allocation5 + $0x2c8] sm:$0xff]
    %v1606 = vld [vmem:[#allocation5 + $0x2d0] sm:$0xff]
    %v1607 = vld [vmem:[#allocation5 + $0x2d8] sm:$0xff]
    %v1608 = vld [vmem:[#allocation5 + $0x2e0] sm:$0xff]
    %v1609 = vld [vmem:[#allocation5 + $0x2e8] sm:$0xff]
    %v1610 = vld [vmem:[#allocation5 + $0x2f0] sm:$0xff]
    %v1611 = vld [vmem:[#allocation5 + $0x2f8] sm:$0xff]
    %v1612 = vld [vmem:[#allocation5 + $0x300] sm:$0xff]
    %v1613 = vld [vmem:[#allocation5 + $0x308] sm:$0xff]
    %v1614 = vld [vmem:[#allocation5 + $0x310] sm:$0xff]
    %v1615 = vld [vmem:[#allocation5 + $0x318] sm:$0xff]
    %v1616 = vld [vmem:[#allocation5 + $0x320] sm:$0xff]
    %v1617 = vld [vmem:[#allocation5 + $0x328] sm:$0xff]
    %v1618 = vld [vmem:[#allocation5 + $0x330] sm:$0xff]
    %v1619 = vld [vmem:[#allocation5 + $0x338] sm:$0xff]
    %v1620 = vld [vmem:[#allocation5 + $0x340] sm:$0xff]
    %v1621 = vld [vmem:[#allocation5 + $0x348] sm:$0xff]
    %v1622 = vld [vmem:[#allocation5 + $0x350] sm:$0xff]
    %v1623 = vld [vmem:[#allocation5 + $0x358] sm:$0xff]
    %v1624 = vld [vmem:[#allocation5 + $0x360] sm:$0xff]
    %v1625 = vld [vmem:[#allocation5 + $0x368] sm:$0xff]
    %v1626 = vld [vmem:[#allocation5 + $0x370] sm:$0xff]
    %v1627 = vld [vmem:[#allocation5 + $0x378] sm:$0xff]
    %v1628 = vld [vmem:[#allocation5 + $0x380] sm:$0xff]
    %v1629 = vld [vmem:[#allocation5 + $0x388] sm:$0xff]
    %v1630 = vld [vmem:[#allocation5 + $0x390] sm:$0xff]
    %v1631 = vld [vmem:[#allocation5 + $0x398] sm:$0xff]
    %v1632 = vld [vmem:[#allocation5 + $0x3a0] sm:$0xff]
    %v1633 = vld [vmem:[#allocation5 + $0x3a8] sm:$0xff]
    %v1634 = vld [vmem:[#allocation5 + $0x3b0] sm:$0xff]
    %v1635 = vld [vmem:[#allocation5 + $0x3b8] sm:$0xff]
    %v1636 = vld [vmem:[#allocation5 + $0x3c0] sm:$0xff]
    %v1637 = vld [vmem:[#allocation5 + $0x3c8] sm:$0xff]
    %v1638 = vld [vmem:[#allocation5 + $0x3d0] sm:$0xff]
    %v1639 = vld [vmem:[#allocation5 + $0x3d8] sm:$0xff]
    %v1640 = vld [vmem:[#allocation5 + $0x3e0] sm:$0xff]
    %v1641 = vld [vmem:[#allocation5 + $0x3e8] sm:$0xff]
    %v1642 = vld [vmem:[#allocation5 + $0x3f0] sm:$0xff]
    %v1643 = vld [vmem:[#allocation5 + $0x3f8] sm:$0xff]
    %v1644 = vld [vmem:[%s8] sm:$0x3]
    %v1646 = vlaneseq
    %v1647 = vshrl.u32 %v1646, 7
    %v1648 = vsub.s32 0, %v1647
    %v1649 = vrot.slane %v1644, %v1648
    %v1650 = vlaneseq
    %v1651 = vshrl.u32 %v1650, 7
    %v1652 = vsub.s32 1, %v1651
    %v1653 = vrot.slane %v1644, %v1652
    %v1784 = vunpack.c.l.b16 %v1516
    %v1785 = vunpack.c.h.b16 %v1516
    %v1786 = vunpack.c.l.b16 %v1517
    %v1787 = vunpack.c.h.b16 %v1517
    %v1788 = vunpack.c.l.b16 %v1518
    %v1789 = vunpack.c.h.b16 %v1518
    %v1790 = vunpack.c.l.b16 %v1519
    %v1791 = vunpack.c.h.b16 %v1519
    %v1792 = vunpack.c.l.b16 %v1520
    %v1793 = vunpack.c.h.b16 %v1520
    %v1794 = vunpack.c.l.b16 %v1521
    %v1795 = vunpack.c.h.b16 %v1521
    %v1796 = vunpack.c.l.b16 %v1522
    %v1797 = vunpack.c.h.b16 %v1522
    %v1798 = vunpack.c.l.b16 %v1523
    %v1799 = vunpack.c.h.b16 %v1523
    %v1800 = vunpack.c.l.b16 %v1524
    %v1801 = vunpack.c.h.b16 %v1524
    %v1802 = vunpack.c.l.b16 %v1525
    %v1803 = vunpack.c.h.b16 %v1525
    %v1804 = vunpack.c.l.b16 %v1526
    %v1805 = vunpack.c.h.b16 %v1526
    %v1806 = vunpack.c.l.b16 %v1527
    %v1807 = vunpack.c.h.b16 %v1527
    %v1808 = vunpack.c.l.b16 %v1528
    %v1809 = vunpack.c.h.b16 %v1528
    %v1810 = vunpack.c.l.b16 %v1529
    %v1811 = vunpack.c.h.b16 %v1529
    %v1812 = vunpack.c.l.b16 %v1530
    %v1813 = vunpack.c.h.b16 %v1530
    %v1814 = vunpack.c.l.b16 %v1531
    %v1815 = vunpack.c.h.b16 %v1531
    %v1816 = vunpack.c.l.b16 %v1532
    %v1817 = vunpack.c.h.b16 %v1532
    %v1818 = vunpack.c.l.b16 %v1533
    %v1819 = vunpack.c.h.b16 %v1533
    %v1820 = vunpack.c.l.b16 %v1534
    %v1821 = vunpack.c.h.b16 %v1534
    %v1822 = vunpack.c.l.b16 %v1535
    %v1823 = vunpack.c.h.b16 %v1535
    %v1824 = vunpack.c.l.b16 %v1536
    %v1825 = vunpack.c.h.b16 %v1536
    %v1826 = vunpack.c.l.b16 %v1537
    %v1827 = vunpack.c.h.b16 %v1537
    %v1828 = vunpack.c.l.b16 %v1538
    %v1829 = vunpack.c.h.b16 %v1538
    %v1830 = vunpack.c.l.b16 %v1539
    %v1831 = vunpack.c.h.b16 %v1539
    %v1832 = vunpack.c.l.b16 %v1540
    %v1833 = vunpack.c.h.b16 %v1540
    %v1834 = vunpack.c.l.b16 %v1541
    %v1835 = vunpack.c.h.b16 %v1541
    %v1836 = vunpack.c.l.b16 %v1542
    %v1837 = vunpack.c.h.b16 %v1542
    %v1838 = vunpack.c.l.b16 %v1543
    %v1839 = vunpack.c.h.b16 %v1543
    %v1840 = vunpack.c.l.b16 %v1544
    %v1841 = vunpack.c.h.b16 %v1544
    %v1842 = vunpack.c.l.b16 %v1545
    %v1843 = vunpack.c.h.b16 %v1545
    %v1844 = vunpack.c.l.b16 %v1546
    %v1845 = vunpack.c.h.b16 %v1546
    %v1846 = vunpack.c.l.b16 %v1547
    %v1847 = vunpack.c.h.b16 %v1547
    %v1848 = vunpack.c.l.b16 %v1548
    %v1849 = vunpack.c.h.b16 %v1548
    %v1850 = vunpack.c.l.b16 %v1549
    %v1851 = vunpack.c.h.b16 %v1549
    %v1852 = vunpack.c.l.b16 %v1550
    %v1853 = vunpack.c.h.b16 %v1550
    %v1854 = vunpack.c.l.b16 %v1551
    %v1855 = vunpack.c.h.b16 %v1551
    %v1856 = vunpack.c.l.b16 %v1552
    %v1857 = vunpack.c.h.b16 %v1552
    %v1858 = vunpack.c.l.b16 %v1553
    %v1859 = vunpack.c.h.b16 %v1553
    %v1860 = vunpack.c.l.b16 %v1554
    %v1861 = vunpack.c.h.b16 %v1554
    %v1862 = vunpack.c.l.b16 %v1555
    %v1863 = vunpack.c.h.b16 %v1555
    %v1864 = vunpack.c.l.b16 %v1556
    %v1865 = vunpack.c.h.b16 %v1556
    %v1866 = vunpack.c.l.b16 %v1557
    %v1867 = vunpack.c.h.b16 %v1557
    %v1868 = vunpack.c.l.b16 %v1558
    %v1869 = vunpack.c.h.b16 %v1558
    %v1870 = vunpack.c.l.b16 %v1559
    %v1871 = vunpack.c.h.b16 %v1559
    %v1872 = vunpack.c.l.b16 %v1560
    %v1873 = vunpack.c.h.b16 %v1560
    %v1874 = vunpack.c.l.b16 %v1561
    %v1875 = vunpack.c.h.b16 %v1561
    %v1876 = vunpack.c.l.b16 %v1562
    %v1877 = vunpack.c.h.b16 %v1562
    %v1878 = vunpack.c.l.b16 %v1563
    %v1879 = vunpack.c.h.b16 %v1563
    %v1880 = vunpack.c.l.b16 %v1564
    %v1881 = vunpack.c.h.b16 %v1564
    %v1882 = vunpack.c.l.b16 %v1565
    %v1883 = vunpack.c.h.b16 %v1565
    %v1884 = vunpack.c.l.b16 %v1566
    %v1885 = vunpack.c.h.b16 %v1566
    %v1886 = vunpack.c.l.b16 %v1567
    %v1887 = vunpack.c.h.b16 %v1567
    %v1888 = vunpack.c.l.b16 %v1568
    %v1889 = vunpack.c.h.b16 %v1568
    %v1890 = vunpack.c.l.b16 %v1569
    %v1891 = vunpack.c.h.b16 %v1569
    %v1892 = vunpack.c.l.b16 %v1570
    %v1893 = vunpack.c.h.b16 %v1570
    %v1894 = vunpack.c.l.b16 %v1571
    %v1895 = vunpack.c.h.b16 %v1571
    %v1896 = vunpack.c.l.b16 %v1572
    %v1897 = vunpack.c.h.b16 %v1572
    %v1898 = vunpack.c.l.b16 %v1573
    %v1899 = vunpack.c.h.b16 %v1573
    %v1900 = vunpack.c.l.b16 %v1574
    %v1901 = vunpack.c.h.b16 %v1574
    %v1902 = vunpack.c.l.b16 %v1575
    %v1903 = vunpack.c.h.b16 %v1575
    %v1904 = vunpack.c.l.b16 %v1576
    %v1905 = vunpack.c.h.b16 %v1576
    %v1906 = vunpack.c.l.b16 %v1577
    %v1907 = vunpack.c.h.b16 %v1577
    %v1908 = vunpack.c.l.b16 %v1578
    %v1909 = vunpack.c.h.b16 %v1578
    %v1910 = vunpack.c.l.b16 %v1579
    %v1911 = vunpack.c.h.b16 %v1579
    %v1912 = vunpack.c.l.b16 %v1580
    %v1913 = vunpack.c.h.b16 %v1580
    %v1914 = vunpack.c.l.b16 %v1581
    %v1915 = vunpack.c.h.b16 %v1581
    %v1916 = vunpack.c.l.b16 %v1582
    %v1917 = vunpack.c.h.b16 %v1582
    %v1918 = vunpack.c.l.b16 %v1583
    %v1919 = vunpack.c.h.b16 %v1583
    %v1920 = vunpack.c.l.b16 %v1584
    %v1921 = vunpack.c.h.b16 %v1584
    %v1922 = vunpack.c.l.b16 %v1585
    %v1923 = vunpack.c.h.b16 %v1585
    %v1924 = vunpack.c.l.b16 %v1586
    %v1925 = vunpack.c.h.b16 %v1586
    %v1926 = vunpack.c.l.b16 %v1587
    %v1927 = vunpack.c.h.b16 %v1587
    %v1928 = vunpack.c.l.b16 %v1588
    %v1929 = vunpack.c.h.b16 %v1588
    %v1930 = vunpack.c.l.b16 %v1589
    %v1931 = vunpack.c.h.b16 %v1589
    %v1932 = vunpack.c.l.b16 %v1590
    %v1933 = vunpack.c.h.b16 %v1590
    %v1934 = vunpack.c.l.b16 %v1591
    %v1935 = vunpack.c.h.b16 %v1591
    %v1936 = vunpack.c.l.b16 %v1592
    %v1937 = vunpack.c.h.b16 %v1592
    %v1938 = vunpack.c.l.b16 %v1593
    %v1939 = vunpack.c.h.b16 %v1593
    %v1940 = vunpack.c.l.b16 %v1594
    %v1941 = vunpack.c.h.b16 %v1594
    %v1942 = vunpack.c.l.b16 %v1595
    %v1943 = vunpack.c.h.b16 %v1595
    %v1944 = vunpack.c.l.b16 %v1596
    %v1945 = vunpack.c.h.b16 %v1596
    %v1946 = vunpack.c.l.b16 %v1597
    %v1947 = vunpack.c.h.b16 %v1597
    %v1948 = vunpack.c.l.b16 %v1598
    %v1949 = vunpack.c.h.b16 %v1598
    %v1950 = vunpack.c.l.b16 %v1599
    %v1951 = vunpack.c.h.b16 %v1599
    %v1952 = vunpack.c.l.b16 %v1600
    %v1953 = vunpack.c.h.b16 %v1600
    %v1954 = vunpack.c.l.b16 %v1601
    %v1955 = vunpack.c.h.b16 %v1601
    %v1956 = vunpack.c.l.b16 %v1602
    %v1957 = vunpack.c.h.b16 %v1602
    %v1958 = vunpack.c.l.b16 %v1603
    %v1959 = vunpack.c.h.b16 %v1603
    %v1960 = vunpack.c.l.b16 %v1604
    %v1961 = vunpack.c.h.b16 %v1604
    %v1962 = vunpack.c.l.b16 %v1605
    %v1963 = vunpack.c.h.b16 %v1605
    %v1964 = vunpack.c.l.b16 %v1606
    %v1965 = vunpack.c.h.b16 %v1606
    %v1966 = vunpack.c.l.b16 %v1607
    %v1967 = vunpack.c.h.b16 %v1607
    %v1968 = vunpack.c.l.b16 %v1608
    %v1969 = vunpack.c.h.b16 %v1608
    %v1970 = vunpack.c.l.b16 %v1609
    %v1971 = vunpack.c.h.b16 %v1609
    %v1972 = vunpack.c.l.b16 %v1610
    %v1973 = vunpack.c.h.b16 %v1610
    %v1974 = vunpack.c.l.b16 %v1611
    %v1975 = vunpack.c.h.b16 %v1611
    %v1976 = vunpack.c.l.b16 %v1612
    %v1977 = vunpack.c.h.b16 %v1612
    %v1978 = vunpack.c.l.b16 %v1613
    %v1979 = vunpack.c.h.b16 %v1613
    %v1980 = vunpack.c.l.b16 %v1614
    %v1981 = vunpack.c.h.b16 %v1614
    %v1982 = vunpack.c.l.b16 %v1615
    %v1983 = vunpack.c.h.b16 %v1615
    %v1984 = vunpack.c.l.b16 %v1616
    %v1985 = vunpack.c.h.b16 %v1616
    %v1986 = vunpack.c.l.b16 %v1617
    %v1987 = vunpack.c.h.b16 %v1617
    %v1988 = vunpack.c.l.b16 %v1618
    %v1989 = vunpack.c.h.b16 %v1618
    %v1990 = vunpack.c.l.b16 %v1619
    %v1991 = vunpack.c.h.b16 %v1619
    %v1992 = vunpack.c.l.b16 %v1620
    %v1993 = vunpack.c.h.b16 %v1620
    %v1994 = vunpack.c.l.b16 %v1621
    %v1995 = vunpack.c.h.b16 %v1621
    %v1996 = vunpack.c.l.b16 %v1622
    %v1997 = vunpack.c.h.b16 %v1622
    %v1998 = vunpack.c.l.b16 %v1623
    %v1999 = vunpack.c.h.b16 %v1623
    %v2000 = vunpack.c.l.b16 %v1624
    %v2001 = vunpack.c.h.b16 %v1624
    %v2002 = vunpack.c.l.b16 %v1625
    %v2003 = vunpack.c.h.b16 %v1625
    %v2004 = vunpack.c.l.b16 %v1626
    %v2005 = vunpack.c.h.b16 %v1626
    %v2006 = vunpack.c.l.b16 %v1627
    %v2007 = vunpack.c.h.b16 %v1627
    %v2008 = vunpack.c.l.b16 %v1628
    %v2009 = vunpack.c.h.b16 %v1628
    %v2010 = vunpack.c.l.b16 %v1629
    %v2011 = vunpack.c.h.b16 %v1629
    %v2012 = vunpack.c.l.b16 %v1630
    %v2013 = vunpack.c.h.b16 %v1630
    %v2014 = vunpack.c.l.b16 %v1631
    %v2015 = vunpack.c.h.b16 %v1631
    %v2016 = vunpack.c.l.b16 %v1632
    %v2017 = vunpack.c.h.b16 %v1632
    %v2018 = vunpack.c.l.b16 %v1633
    %v2019 = vunpack.c.h.b16 %v1633
    %v2020 = vunpack.c.l.b16 %v1634
    %v2021 = vunpack.c.h.b16 %v1634
    %v2022 = vunpack.c.l.b16 %v1635
    %v2023 = vunpack.c.h.b16 %v1635
    %v2024 = vunpack.c.l.b16 %v1636
    %v2025 = vunpack.c.h.b16 %v1636
    %v2026 = vunpack.c.l.b16 %v1637
    %v2027 = vunpack.c.h.b16 %v1637
    %v2028 = vunpack.c.l.b16 %v1638
    %v2029 = vunpack.c.h.b16 %v1638
    %v2030 = vunpack.c.l.b16 %v1639
    %v2031 = vunpack.c.h.b16 %v1639
    %v2032 = vunpack.c.l.b16 %v1640
    %v2033 = vunpack.c.h.b16 %v1640
    %v2034 = vunpack.c.l.b16 %v1641
    %v2035 = vunpack.c.h.b16 %v1641
    %v2036 = vunpack.c.l.b16 %v1642
    %v2037 = vunpack.c.h.b16 %v1642
    %v2038 = vunpack.c.l.b16 %v1643
    %v2039 = vunpack.c.h.b16 %v1643
    %v2040 = vpack.c.b16 %v1786, %v1784
    %v2041 = vpack.c.b16 %v1787, %v1785
    %v2042 = vpack.c.b16 %v1790, %v1788
    %v2043 = vpack.c.b16 %v1791, %v1789
    %v2044 = vpack.c.b16 %v1794, %v1792
    %v2045 = vpack.c.b16 %v1795, %v1793
    %v2046 = vpack.c.b16 %v1798, %v1796
    %v2047 = vpack.c.b16 %v1799, %v1797
    %v2048 = vpack.c.b16 %v1802, %v1800
    %v2049 = vpack.c.b16 %v1803, %v1801
    %v2050 = vpack.c.b16 %v1806, %v1804
    %v2051 = vpack.c.b16 %v1807, %v1805
    %v2052 = vpack.c.b16 %v1810, %v1808
    %v2053 = vpack.c.b16 %v1811, %v1809
    %v2054 = vpack.c.b16 %v1814, %v1812
    %v2055 = vpack.c.b16 %v1815, %v1813
    %v2056 = vpack.c.b16 %v1818, %v1816
    %v2057 = vpack.c.b16 %v1819, %v1817
    %v2058 = vpack.c.b16 %v1822, %v1820
    %v2059 = vpack.c.b16 %v1823, %v1821
    %v2060 = vpack.c.b16 %v1826, %v1824
    %v2061 = vpack.c.b16 %v1827, %v1825
    %v2062 = vpack.c.b16 %v1830, %v1828
    %v2063 = vpack.c.b16 %v1831, %v1829
    %v2064 = vpack.c.b16 %v1834, %v1832
    %v2065 = vpack.c.b16 %v1835, %v1833
    %v2066 = vpack.c.b16 %v1838, %v1836
    %v2067 = vpack.c.b16 %v1839, %v1837
    %v2068 = vpack.c.b16 %v1842, %v1840
    %v2069 = vpack.c.b16 %v1843, %v1841
    %v2070 = vpack.c.b16 %v1846, %v1844
    %v2071 = vpack.c.b16 %v1847, %v1845
    %v2072 = vpack.c.b16 %v1850, %v1848
    %v2073 = vpack.c.b16 %v1851, %v1849
    %v2074 = vpack.c.b16 %v1854, %v1852
    %v2075 = vpack.c.b16 %v1855, %v1853
    %v2076 = vpack.c.b16 %v1858, %v1856
    %v2077 = vpack.c.b16 %v1859, %v1857
    %v2078 = vpack.c.b16 %v1862, %v1860
    %v2079 = vpack.c.b16 %v1863, %v1861
    %v2080 = vpack.c.b16 %v1866, %v1864
    %v2081 = vpack.c.b16 %v1867, %v1865
    %v2082 = vpack.c.b16 %v1870, %v1868
    %v2083 = vpack.c.b16 %v1871, %v1869
    %v2084 = vpack.c.b16 %v1874, %v1872
    %v2085 = vpack.c.b16 %v1875, %v1873
    %v2086 = vpack.c.b16 %v1878, %v1876
    %v2087 = vpack.c.b16 %v1879, %v1877
    %v2088 = vpack.c.b16 %v1882, %v1880
    %v2089 = vpack.c.b16 %v1883, %v1881
    %v2090 = vpack.c.b16 %v1886, %v1884
    %v2091 = vpack.c.b16 %v1887, %v1885
    %v2092 = vpack.c.b16 %v1890, %v1888
    %v2093 = vpack.c.b16 %v1891, %v1889
    %v2094 = vpack.c.b16 %v1894, %v1892
    %v2095 = vpack.c.b16 %v1895, %v1893
    %v2096 = vpack.c.b16 %v1898, %v1896
    %v2097 = vpack.c.b16 %v1899, %v1897
    %v2098 = vpack.c.b16 %v1902, %v1900
    %v2099 = vpack.c.b16 %v1903, %v1901
    %v2100 = vpack.c.b16 %v1906, %v1904
    %v2101 = vpack.c.b16 %v1907, %v1905
    %v2102 = vpack.c.b16 %v1910, %v1908
    %v2103 = vpack.c.b16 %v1911, %v1909
    %v2104 = vpack.c.b16 %v1914, %v1912
    %v2105 = vpack.c.b16 %v1915, %v1913
    %v2106 = vpack.c.b16 %v1918, %v1916
    %v2107 = vpack.c.b16 %v1919, %v1917
    %v2108 = vpack.c.b16 %v1922, %v1920
    %v2109 = vpack.c.b16 %v1923, %v1921
    %v2110 = vpack.c.b16 %v1926, %v1924
    %v2111 = vpack.c.b16 %v1927, %v1925
    %v2112 = vpack.c.b16 %v1930, %v1928
    %v2113 = vpack.c.b16 %v1931, %v1929
    %v2114 = vpack.c.b16 %v1934, %v1932
    %v2115 = vpack.c.b16 %v1935, %v1933
    %v2116 = vpack.c.b16 %v1938, %v1936
    %v2117 = vpack.c.b16 %v1939, %v1937
    %v2118 = vpack.c.b16 %v1942, %v1940
    %v2119 = vpack.c.b16 %v1943, %v1941
    %v2120 = vpack.c.b16 %v1946, %v1944
    %v2121 = vpack.c.b16 %v1947, %v1945
    %v2122 = vpack.c.b16 %v1950, %v1948
    %v2123 = vpack.c.b16 %v1951, %v1949
    %v2124 = vpack.c.b16 %v1954, %v1952
    %v2125 = vpack.c.b16 %v1955, %v1953
    %v2126 = vpack.c.b16 %v1958, %v1956
    %v2127 = vpack.c.b16 %v1959, %v1957
    %v2128 = vpack.c.b16 %v1962, %v1960
    %v2129 = vpack.c.b16 %v1963, %v1961
    %v2130 = vpack.c.b16 %v1966, %v1964
    %v2131 = vpack.c.b16 %v1967, %v1965
    %v2132 = vpack.c.b16 %v1970, %v1968
    %v2133 = vpack.c.b16 %v1971, %v1969
    %v2134 = vpack.c.b16 %v1974, %v1972
    %v2135 = vpack.c.b16 %v1975, %v1973
    %v2136 = vpack.c.b16 %v1978, %v1976
    %v2137 = vpack.c.b16 %v1979, %v1977
    %v2138 = vpack.c.b16 %v1982, %v1980
    %v2139 = vpack.c.b16 %v1983, %v1981
    %v2140 = vpack.c.b16 %v1986, %v1984
    %v2141 = vpack.c.b16 %v1987, %v1985
    %v2142 = vpack.c.b16 %v1990, %v1988
    %v2143 = vpack.c.b16 %v1991, %v1989
    %v2144 = vpack.c.b16 %v1994, %v1992
    %v2145 = vpack.c.b16 %v1995, %v1993
    %v2146 = vpack.c.b16 %v1998, %v1996
    %v2147 = vpack.c.b16 %v1999, %v1997
    %v2148 = vpack.c.b16 %v2002, %v2000
    %v2149 = vpack.c.b16 %v2003, %v2001
    %v2150 = vpack.c.b16 %v2006, %v2004
    %v2151 = vpack.c.b16 %v2007, %v2005
    %v2152 = vpack.c.b16 %v2010, %v2008
    %v2153 = vpack.c.b16 %v2011, %v2009
    %v2154 = vpack.c.b16 %v2014, %v2012
    %v2155 = vpack.c.b16 %v2015, %v2013
    %v2156 = vpack.c.b16 %v2018, %v2016
    %v2157 = vpack.c.b16 %v2019, %v2017
    %v2158 = vpack.c.b16 %v2022, %v2020
    %v2159 = vpack.c.b16 %v2023, %v2021
    %v2160 = vpack.c.b16 %v2026, %v2024
    %v2161 = vpack.c.b16 %v2027, %v2025
    %v2162 = vpack.c.b16 %v2030, %v2028
    %v2163 = vpack.c.b16 %v2031, %v2029
    %v2164 = vpack.c.b16 %v2034, %v2032
    %v2165 = vpack.c.b16 %v2035, %v2033
    %v2166 = vpack.c.b16 %v2038, %v2036
    %v2167 = vpack.c.b16 %v2039, %v2037
    %2296 = vmatprep.subr.bf16.mxu0 %v2041
    %2297 = vmatpush1.bf16.msra.mxu0 %v2040
    %2298 = vmatprep.subr.bf16.mxu0 %v2043
    %2299 = vmatpush1.bf16.msra.mxu0 %v2042
    %2300 = vmatprep.subr.bf16.mxu0 %v2045
    %2301 = vmatpush1.bf16.msra.mxu0 %v2044
    %2302 = vmatprep.subr.bf16.mxu0 %v2047
    %2303 = vmatpush1.bf16.msra.mxu0 %v2046
    %2304 = vmatprep.subr.bf16.mxu0 %v2049
    %2305 = vmatpush1.bf16.msra.mxu0 %v2048
    %2306 = vmatprep.subr.bf16.mxu0 %v2051
    %2307 = vmatpush1.bf16.msra.mxu0 %v2050
    %2308 = vmatprep.subr.bf16.mxu0 %v2053
    %2309 = vmatpush1.bf16.msra.mxu0 %v2052
    %2310 = vmatprep.subr.bf16.mxu0 %v2055
    %2311 = vmatpush1.bf16.msra.mxu0 %v2054
    %2312 = vmatprep.subr.bf16.mxu0 %v2057
    %2313 = vmatpush1.bf16.msra.mxu0 %v2056
    %2314 = vmatprep.subr.bf16.mxu0 %v2059
    %2315 = vmatpush1.bf16.msra.mxu0 %v2058
    %2316 = vmatprep.subr.bf16.mxu0 %v2061
    %2317 = vmatpush1.bf16.msra.mxu0 %v2060
    %2318 = vmatprep.subr.bf16.mxu0 %v2063
    %2319 = vmatpush1.bf16.msra.mxu0 %v2062
    %2320 = vmatprep.subr.bf16.mxu0 %v2065
    %2321 = vmatpush1.bf16.msra.mxu0 %v2064
    %2322 = vmatprep.subr.bf16.mxu0 %v2067
    %2323 = vmatpush1.bf16.msra.mxu0 %v2066
    %2324 = vmatprep.subr.bf16.mxu0 %v2069
    %2325 = vmatpush1.bf16.msra.mxu0 %v2068
    %2326 = vmatprep.subr.bf16.mxu0 %v2071
    %2327 = vmatpush1.bf16.msra.mxu0 %v2070
    %2328 = vmatprep.mubr.bf16.mxu0 %v1509
    %2329 = vmatmul.mubr.bf16.gmra.mrb[0].mxu0 %v1508
    %v2330 = vpop.f32.mrb[0].mxu0
    %v2331 = vadd.f32 %v1649, %v2330
    %v2332 = vpop.f32.mrb[0].mxu0
    %v2333 = vadd.f32 %v1653, %v2332
    %v2334 = vpop.f32.mrb[0].mxu0
    %v2335 = vpop.f32.mrb[0].mxu0
    %2336 = vdwg.mxu0
    %2337 = vmatprep.subr.bf16.mxu0 %v2073
    %2338 = vmatpush1.bf16.msra.mxu0 %v2072
    %2339 = vmatprep.subr.bf16.mxu0 %v2075
    %2340 = vmatpush1.bf16.msra.mxu0 %v2074
    %2341 = vmatprep.subr.bf16.mxu0 %v2077
    %2342 = vmatpush1.bf16.msra.mxu0 %v2076
    %2343 = vmatprep.subr.bf16.mxu0 %v2079
    %2344 = vmatpush1.bf16.msra.mxu0 %v2078
    %2345 = vmatprep.subr.bf16.mxu0 %v2081
    %2346 = vmatpush1.bf16.msra.mxu0 %v2080
    %2347 = vmatprep.subr.bf16.mxu0 %v2083
    %2348 = vmatpush1.bf16.msra.mxu0 %v2082
    %2349 = vmatprep.subr.bf16.mxu0 %v2085
    %2350 = vmatpush1.bf16.msra.mxu0 %v2084
    %2351 = vmatprep.subr.bf16.mxu0 %v2087
    %2352 = vmatpush1.bf16.msra.mxu0 %v2086
    %2353 = vmatprep.subr.bf16.mxu0 %v2089
    %2354 = vmatpush1.bf16.msra.mxu0 %v2088
    %2355 = vmatprep.subr.bf16.mxu0 %v2091
    %2356 = vmatpush1.bf16.msra.mxu0 %v2090
    %2357 = vmatprep.subr.bf16.mxu0 %v2093
    %2358 = vmatpush1.bf16.msra.mxu0 %v2092
    %2359 = vmatprep.subr.bf16.mxu0 %v2095
    %2360 = vmatpush1.bf16.msra.mxu0 %v2094
    %2361 = vmatprep.subr.bf16.mxu0 %v2097
    %2362 = vmatpush1.bf16.msra.mxu0 %v2096
    %2363 = vmatprep.subr.bf16.mxu0 %v2099
    %2364 = vmatpush1.bf16.msra.mxu0 %v2098
    %2365 = vmatprep.subr.bf16.mxu0 %v2101
    %2366 = vmatpush1.bf16.msra.mxu0 %v2100
    %2367 = vmatprep.subr.bf16.mxu0 %v2103
    %2368 = vmatpush1.bf16.msra.mxu0 %v2102
    %2369 = vmatprep.mubr.bf16.mxu0 %v1511
    %2370 = vmatmul.mubr.bf16.gmra.mrb[0].mxu0 %v1510
    %v2371 = vpop.f32.mrb[0].mxu0
    %v2372 = vadd.f32 %v2331, %v2371
    %v2373 = vpop.f32.mrb[0].mxu0
    %v2374 = vadd.f32 %v2333, %v2373
    %v2375 = vpop.f32.mrb[0].mxu0
    %v2376 = vpop.f32.mrb[0].mxu0
    %2377 = vdwg.mxu0
    %2378 = vmatprep.subr.bf16.mxu0 %v2105
    %2379 = vmatpush1.bf16.msra.mxu0 %v2104
    %2380 = vmatprep.subr.bf16.mxu0 %v2107
    %2381 = vmatpush1.bf16.msra.mxu0 %v2106
    %2382 = vmatprep.subr.bf16.mxu0 %v2109
    %2383 = vmatpush1.bf16.msra.mxu0 %v2108
    %2384 = vmatprep.subr.bf16.mxu0 %v2111
    %2385 = vmatpush1.bf16.msra.mxu0 %v2110
    %2386 = vmatprep.subr.bf16.mxu0 %v2113
    %2387 = vmatpush1.bf16.msra.mxu0 %v2112
    %2388 = vmatprep.subr.bf16.mxu0 %v2115
    %2389 = vmatpush1.bf16.msra.mxu0 %v2114
    %2390 = vmatprep.subr.bf16.mxu0 %v2117
    %2391 = vmatpush1.bf16.msra.mxu0 %v2116
    %2392 = vmatprep.subr.bf16.mxu0 %v2119
    %2393 = vmatpush1.bf16.msra.mxu0 %v2118
    %2394 = vmatprep.subr.bf16.mxu0 %v2121
    %2395 = vmatpush1.bf16.msra.mxu0 %v2120
    %2396 = vmatprep.subr.bf16.mxu0 %v2123
    %2397 = vmatpush1.bf16.msra.mxu0 %v2122
    %2398 = vmatprep.subr.bf16.mxu0 %v2125
    %2399 = vmatpush1.bf16.msra.mxu0 %v2124
    %2400 = vmatprep.subr.bf16.mxu0 %v2127
    %2401 = vmatpush1.bf16.msra.mxu0 %v2126
    %2402 = vmatprep.subr.bf16.mxu0 %v2129
    %2403 = vmatpush1.bf16.msra.mxu0 %v2128
    %2404 = vmatprep.subr.bf16.mxu0 %v2131
    %2405 = vmatpush1.bf16.msra.mxu0 %v2130
    %2406 = vmatprep.subr.bf16.mxu0 %v2133
    %2407 = vmatpush1.bf16.msra.mxu0 %v2132
    %2408 = vmatprep.subr.bf16.mxu0 %v2135
    %2409 = vmatpush1.bf16.msra.mxu0 %v2134
    %2410 = vmatprep.mubr.bf16.mxu0 %v1513
    %2411 = vmatmul.mubr.bf16.gmra.mrb[0].mxu0 %v1512
    %v2412 = vpop.f32.mrb[0].mxu0
    %v2413 = vadd.f32 %v2372, %v2412
    %v2414 = vpop.f32.mrb[0].mxu0
    %v2415 = vadd.f32 %v2374, %v2414
    %v2416 = vpop.f32.mrb[0].mxu0
    %v2417 = vpop.f32.mrb[0].mxu0
    %2418 = vdwg.mxu0
    %2419 = vmatprep.subr.bf16.mxu0 %v2137
    %2420 = vmatpush1.bf16.msra.mxu0 %v2136
    %2421 = vmatprep.subr.bf16.mxu0 %v2139
    %2422 = vmatpush1.bf16.msra.mxu0 %v2138
    %2423 = vmatprep.subr.bf16.mxu0 %v2141
    %2424 = vmatpush1.bf16.msra.mxu0 %v2140
    %2425 = vmatprep.subr.bf16.mxu0 %v2143
    %2426 = vmatpush1.bf16.msra.mxu0 %v2142
    %2427 = vmatprep.subr.bf16.mxu0 %v2145
    %2428 = vmatpush1.bf16.msra.mxu0 %v2144
    %2429 = vmatprep.subr.bf16.mxu0 %v2147
    %2430 = vmatpush1.bf16.msra.mxu0 %v2146
    %2431 = vmatprep.subr.bf16.mxu0 %v2149
    %2432 = vmatpush1.bf16.msra.mxu0 %v2148
    %2433 = vmatprep.subr.bf16.mxu0 %v2151
    %2434 = vmatpush1.bf16.msra.mxu0 %v2150
    %2435 = vmatprep.subr.bf16.mxu0 %v2153
    %2436 = vmatpush1.bf16.msra.mxu0 %v2152
    %2437 = vmatprep.subr.bf16.mxu0 %v2155
    %2438 = vmatpush1.bf16.msra.mxu0 %v2154
    %2439 = vmatprep.subr.bf16.mxu0 %v2157
    %2440 = vmatpush1.bf16.msra.mxu0 %v2156
    %2441 = vmatprep.subr.bf16.mxu0 %v2159
    %2442 = vmatpush1.bf16.msra.mxu0 %v2158
    %2443 = vmatprep.subr.bf16.mxu0 %v2161
    %2444 = vmatpush1.bf16.msra.mxu0 %v2160
    %2445 = vmatprep.subr.bf16.mxu0 %v2163
    %2446 = vmatpush1.bf16.msra.mxu0 %v2162
    %2447 = vmatprep.subr.bf16.mxu0 %v2165
    %2448 = vmatpush1.bf16.msra.mxu0 %v2164
    %2449 = vmatprep.subr.bf16.mxu0 %v2167
    %2450 = vmatpush1.bf16.msra.mxu0 %v2166
    %2451 = vmatprep.mubr.bf16.mxu0 %v1515
    %2452 = vmatmul.mubr.bf16.gmra.mrb[0].mxu0 %v1514
    %v2453 = vpop.f32.mrb[0].mxu0
    %v2454 = vadd.f32 %v2413, %v2453
    %v2455 = vpop.f32.mrb[0].mxu0
    %v2456 = vadd.f32 %v2415, %v2455
    %v2457 = vpop.f32.mrb[0].mxu0
    %v2458 = vpop.f32.mrb[0].mxu0
    %2459 = vdwg.mxu0
    %v2460 = vmax.f32 %v2454, 0.0
    %v2461 = vmax.f32 %v2456, 0.0
    %v2462 = vpack.c.bf16 %v2460, %v2460
    %v2463 = vpack.c.bf16 %v2461, %v2461
    %v2464 = vld [vmem:[%s9] sm:$0xf]
    %v2465 = vld [vmem:[%s9 + $0x4] sm:$0xf]
    %v2466 = vld [vmem:[%s9 + $0x8] sm:$0xf]
    %v2467 = vld [vmem:[%s9 + $0xc] sm:$0xf]
    %v2468 = vld [vmem:[%s9 + $0x10] sm:$0xf]
    %v2469 = vld [vmem:[%s9 + $0x14] sm:$0xf]
    %v2470 = vld [vmem:[%s9 + $0x18] sm:$0xf]
    %v2471 = vld [vmem:[%s9 + $0x1c] sm:$0xf]
    %v2472 = vld [vmem:[%s9 + $0x20] sm:$0xf]
    %v2473 = vld [vmem:[%s9 + $0x24] sm:$0xf]
    %v2474 = vld [vmem:[%s9 + $0x28] sm:$0xf]
    %v2475 = vld [vmem:[%s9 + $0x2c] sm:$0xf]
    %v2476 = vld [vmem:[%s9 + $0x30] sm:$0xf]
    %v2477 = vld [vmem:[%s9 + $0x34] sm:$0xf]
    %v2478 = vld [vmem:[%s9 + $0x38] sm:$0xf]
    %v2479 = vld [vmem:[%s9 + $0x3c] sm:$0xf]
    %v2480 = vld [vmem:[%s9 + $0x40] sm:$0xf]
    %v2481 = vld [vmem:[%s9 + $0x44] sm:$0xf]
    %v2482 = vld [vmem:[%s9 + $0x48] sm:$0xf]
    %v2483 = vld [vmem:[%s9 + $0x4c] sm:$0xf]
    %v2484 = vld [vmem:[%s9 + $0x50] sm:$0xf]
    %v2485 = vld [vmem:[%s9 + $0x54] sm:$0xf]
    %v2486 = vld [vmem:[%s9 + $0x58] sm:$0xf]
    %v2487 = vld [vmem:[%s9 + $0x5c] sm:$0xf]
    %v2488 = vld [vmem:[%s9 + $0x60] sm:$0xf]
    %v2489 = vld [vmem:[%s9 + $0x64] sm:$0xf]
    %v2490 = vld [vmem:[%s9 + $0x68] sm:$0xf]
    %v2491 = vld [vmem:[%s9 + $0x6c] sm:$0xf]
    %v2492 = vld [vmem:[%s9 + $0x70] sm:$0xf]
    %v2493 = vld [vmem:[%s9 + $0x74] sm:$0xf]
    %v2494 = vld [vmem:[%s9 + $0x78] sm:$0xf]
    %v2495 = vld [vmem:[%s9 + $0x7c] sm:$0xf]
    %v2496 = vld [vmem:[%s10] sm:$0x1]
    %v2498 = vlaneseq
    %v2499 = vshrl.u32 %v2498, 7
    %v2500 = vsub.s32 0, %v2499
    %v2501 = vrot.slane %v2496, %v2500
    %v2535 = vunpack.c.l.b16 %v2464
    %v2536 = vunpack.c.l.b16 %v2465
    %v2537 = vunpack.c.l.b16 %v2466
    %v2538 = vunpack.c.l.b16 %v2467
    %v2539 = vunpack.c.l.b16 %v2468
    %v2540 = vunpack.c.l.b16 %v2469
    %v2541 = vunpack.c.l.b16 %v2470
    %v2542 = vunpack.c.l.b16 %v2471
    %v2543 = vunpack.c.l.b16 %v2472
    %v2544 = vunpack.c.l.b16 %v2473
    %v2545 = vunpack.c.l.b16 %v2474
    %v2546 = vunpack.c.l.b16 %v2475
    %v2547 = vunpack.c.l.b16 %v2476
    %v2548 = vunpack.c.l.b16 %v2477
    %v2549 = vunpack.c.l.b16 %v2478
    %v2550 = vunpack.c.l.b16 %v2479
    %v2551 = vunpack.c.l.b16 %v2480
    %v2552 = vunpack.c.l.b16 %v2481
    %v2553 = vunpack.c.l.b16 %v2482
    %v2554 = vunpack.c.l.b16 %v2483
    %v2555 = vunpack.c.l.b16 %v2484
    %v2556 = vunpack.c.l.b16 %v2485
    %v2557 = vunpack.c.l.b16 %v2486
    %v2558 = vunpack.c.l.b16 %v2487
    %v2559 = vunpack.c.l.b16 %v2488
    %v2560 = vunpack.c.l.b16 %v2489
    %v2561 = vunpack.c.l.b16 %v2490
    %v2562 = vunpack.c.l.b16 %v2491
    %v2563 = vunpack.c.l.b16 %v2492
    %v2564 = vunpack.c.l.b16 %v2493
    %v2565 = vunpack.c.l.b16 %v2494
    %v2566 = vunpack.c.l.b16 %v2495
    %v2567 = vpack.c.b16 %v2536, %v2535
    %v2568 = vpack.c.b16 %v2538, %v2537
    %v2569 = vpack.c.b16 %v2540, %v2539
    %v2570 = vpack.c.b16 %v2542, %v2541
    %v2571 = vpack.c.b16 %v2544, %v2543
    %v2572 = vpack.c.b16 %v2546, %v2545
    %v2573 = vpack.c.b16 %v2548, %v2547
    %v2574 = vpack.c.b16 %v2550, %v2549
    %v2575 = vpack.c.b16 %v2552, %v2551
    %v2576 = vpack.c.b16 %v2554, %v2553
    %v2577 = vpack.c.b16 %v2556, %v2555
    %v2578 = vpack.c.b16 %v2558, %v2557
    %v2579 = vpack.c.b16 %v2560, %v2559
    %v2580 = vpack.c.b16 %v2562, %v2561
    %v2581 = vpack.c.b16 %v2564, %v2563
    %v2582 = vpack.c.b16 %v2566, %v2565
    %2599 = vmatprep.subr.bf16.mxu0 0
    %2600 = vmatpush1.bf16.msra.mxu0 %v2567
    %2601 = vmatprep.subr.bf16.mxu0 0
    %2602 = vmatpush1.bf16.msra.mxu0 %v2568
    %2603 = vmatprep.subr.bf16.mxu0 0
    %2604 = vmatpush1.bf16.msra.mxu0 %v2569
    %2605 = vmatprep.subr.bf16.mxu0 0
    %2606 = vmatpush1.bf16.msra.mxu0 %v2570
    %2607 = vmatprep.subr.bf16.mxu0 0
    %2608 = vmatpush1.bf16.msra.mxu0 %v2571
    %2609 = vmatprep.subr.bf16.mxu0 0
    %2610 = vmatpush1.bf16.msra.mxu0 %v2572
    %2611 = vmatprep.subr.bf16.mxu0 0
    %2612 = vmatpush1.bf16.msra.mxu0 %v2573
    %2613 = vmatprep.subr.bf16.mxu0 0
    %2614 = vmatpush1.bf16.msra.mxu0 %v2574
    %2615 = vmatprep.subr.bf16.mxu0 0
    %2616 = vmatpush1.bf16.msra.mxu0 %v2575
    %2617 = vmatprep.subr.bf16.mxu0 0
    %2618 = vmatpush1.bf16.msra.mxu0 %v2576
    %2619 = vmatprep.subr.bf16.mxu0 0
    %2620 = vmatpush1.bf16.msra.mxu0 %v2577
    %2621 = vmatprep.subr.bf16.mxu0 0
    %2622 = vmatpush1.bf16.msra.mxu0 %v2578
    %2623 = vmatprep.subr.bf16.mxu0 0
    %2624 = vmatpush1.bf16.msra.mxu0 %v2579
    %2625 = vmatprep.subr.bf16.mxu0 0
    %2626 = vmatpush1.bf16.msra.mxu0 %v2580
    %2627 = vmatprep.subr.bf16.mxu0 0
    %2628 = vmatpush1.bf16.msra.mxu0 %v2581
    %2629 = vmatprep.subr.bf16.mxu0 0
    %2630 = vmatpush1.bf16.msra.mxu0 %v2582
    %2631 = vmatprep.mubr.bf16.mxu0 %v2463
    %2632 = vmatmul.mubr.bf16.gmra.mrb[0].mxu0 %v2462
    %v2633 = vpop.f32.mrb[0].mxu0
    %v2634 = vadd.f32 %v2501, %v2633
    %v2635 = vpop.f32.mrb[0].mxu0
    %v2636 = vpop.f32.mrb[0].mxu0
    %v2637 = vpop.f32.mrb[0].mxu0
    %2638 = vdwg.mxu0
    %v2639 = vld [vmem:[%s11] sm:$0x1]
    %v2641 = vlaneseq
    %v2642 = vshrl.u32 %v2641, 7
    %v2643 = vsub.s32 0, %v2642
    %v2644 = vrot.slane %v2639, %v2643
    %v2646 = vmul.f32 %v2634, %v2644
    %v2647 = vld [vmem:[%s12] sm:$0x1]
    %v2649 = vlaneseq
    %v2650 = vshrl.u32 %v2649, 7
    %v2651 = vsub.s32 0, %v2650
    %v2652 = vrot.slane %v2647, %v2651
    %v2654 = vadd.f32 %v2646, %v2652
    %2655 = vst [vmem:[#allocation8] sm:$0xff] %v2654
    // Predicated region
    $region58: #{tpu_custom_call.1} parent=1 // pred_check
      _
    $region59: #{tpu_custom_call.1} parent=1 // pred_check_branch
      %2657 = sbr.rel (0) target = $region61
    $region60: #{tpu_custom_call.1} parent=1 // pred_region
      %s2659 = ssub.s32 128, 128
      %2660 = vsyncadd [#allocation7], %s2659
      %s2662 = sshll.u32 [#allocation8], 4
      %s2663 = int_to_ptr.vmem [resolvable:$true] %s2662
      %2665 = dma.vmem_to_hbm [thread:$0]  %s2663, 128, %s13, [#allocation7]
    $region61: #{tpu_custom_call.1} parent=1 // pred_fallthru
      _
    // Predicated region
    $region62: #{tpu_custom_call.1} parent=1 // pred_check
      _
    $region63: #{tpu_custom_call.1} parent=1 // pred_check_branch
      %2667 = sbr.rel (0) target = $region65
    $region64: #{tpu_custom_call.1} parent=1 // pred_region
      %2668 = dma.done [#allocation7], 128
    $region65: #{tpu_custom_call.1} parent=1 // pred_fallthru
      _
    %2669 = vsyncpa [#allocation6], 1
    %2670 = vsyncpa [#allocation7], 1

</llo_original>
